<compile_context>
chip_gen: v7x
topology: tpu7x:2x2x1
jax: 0.10.0
libtpu: 0.0.40
codegen_flags: <defaults>
</compile_context>

<pallas_src>
import jax
import jax.numpy as jnp
from jax import lax
from jax.experimental import pallas as pl
from jax.experimental.pallas import tpu as pltpu

# Make the XLA reference einsums run at full f32 precision so the numeric check
# against the kernel (which accumulates in f32) is meaningful.
jax.config.update("jax_default_matmul_precision", "highest")

_LN_EPS = 1e-5  # PyTorch nn.LayerNorm default


# ------------------------------------------------------------------ kernel

def _gc_layer_kernel(x_ref, wmat_ref, wvec_ref, o_ref, acc_ref):
    """All `depth` ContextBlocks for a slab of `BB` batch images.

    x_ref    : (BB, C, P)  bf16 activation, pixels (P = H*W) in lanes.
    wmat_ref : (depth, C, 2*planes + 1) f32  packed [W1^T | W2 | b2].
    wvec_ref : (depth, 1, 3*planes + 1 + C) f32 packed [b1 | gamma | beta | bm | wm].
    o_ref    : (BB, C, P)  bf16 output.
    acc_ref  : (BB, C, P)  f32 VMEM scratch (running activation).
    """
    BB = x_ref.shape[0]
    depth = wmat_ref.shape[0]
    planes = (wmat_ref.shape[2] - 1) // 2
    C = x_ref.shape[1]

    # Copy x into VMEM-resident f32 working buffer exactly once.
    acc_ref[...] = x_ref[...].astype(jnp.float32)

    for d in range(depth):  # depth is tiny here (2) -> static unroll is fine.
        # ---- unpack this block's weights (static slices of the packed refs) --
        w1t   = wmat_ref[d, :, 0:planes]                       # (C, planes)  = W1^T
        w2    = wmat_ref[d, :, planes:2 * planes]              # (C, planes)
        b2    = wmat_ref[d, :, 2 * planes:2 * planes + 1]      # (C, 1)
        b1    = wvec_ref[d, :, 0:planes]                       # (1, planes)
        gamma = wvec_ref[d, :, planes:2 * planes]              # (1, planes)
        beta  = wvec_ref[d, :, 2 * planes:3 * planes]          # (1, planes)
        bm    = wvec_ref[d, :, 3 * planes:3 * planes + 1]      # (1, 1)
        wm    = wvec_ref[d, :, 3 * planes + 1:3 * planes + 1 + C]  # (1, C)

        for b in range(BB):
            x = acc_ref[b]                                     # (C, P) f32

            # ---- spatial attention pooling (pooling_type='att') -------------
            # conv_mask (1x1 conv C->1): full-lane-output MXU dot.
            logits = jnp.dot(wm, x, preferred_element_type=jnp.float32) + bm  # (1, P)
            m = jnp.max(logits, axis=-1, keepdims=True)
            e = jnp.exp(logits - m)                             # (1, P)
            s = jnp.sum(e, axis=-1, keepdims=True)              # (1, 1)
            # Unnormalized context, then one EUP reciprocal (no (1,P) divide).
            ctx = jnp.sum(x * e, axis=-1, keepdims=True)        # (C, 1)
            ctx = ctx * pl.reciprocal(s, approx=True)           # (C, 1)

            # ---- channel_add_conv on the VPU (no N=1 MXU dots) --------------
            # conv1x1 C->planes: sublane reduce of W1^T * ctx  -> (1, planes)
            h = jnp.sum(w1t * ctx, axis=0, keepdims=True) + b1  # (1, planes)
            # LayerNorm over planes (lane reduce).
            mu = jnp.mean(h, axis=-1, keepdims=True)
            var = jnp.mean(jnp.square(h - mu), axis=-1, keepdims=True)
            h = (h - mu) * lax.rsqrt(var + _LN_EPS)
            h = h * gamma + beta
            h = jnp.maximum(h, 0.0)                              # ReLU
            # conv1x1 planes->C: lane reduce of W2 * h -> (C, 1)
            add = jnp.sum(w2 * h, axis=-1, keepdims=True) + b2   # (C, 1)

            # ---- residual, written back in place (VMEM-resident) ------------
            acc_ref[b] = x + add

    o_ref[...] = acc_ref[...].astype(o_ref.dtype)


# ------------------------------------------------------------------ wrapper

def basic_layer_forward(x_nchw, params):
    """BasicLayer forward: `depth` ContextBlocks (att pooling + channel_add),
    downsample=None.  Input NCHW (any float dtype); activation I/O through the
    kernel is bf16; output is NCHW bf16."""
    B, C, H, W = x_nchw.shape
    P = H * W
    depth, planes = params["w1"].shape[0], params["w1"].shape[1]

    # bf16 activation at the pallas_call boundary (memory-bound roofline).
    x_flat = x_nchw.reshape(B, C, P).astype(jnp.bfloat16)

    # Pack the 9 tiny per-block weight tensors into 2 stacked arrays
    # (in real use this would be done once at parameter-load time).
    wmat = jnp.concatenate(
        [
            jnp.transpose(params["w1"], (0, 2, 1)),   # (depth, C, planes)  W1^T
            params["w2"],                             # (depth, C, planes)  W2
            params["b2"][:, :, None],                 # (depth, C, 1)
        ],
        axis=-1,
    ).astype(jnp.float32)                             # (depth, C, 2*planes + 1)
    wvec = jnp.concatenate(
        [
            params["b1"][:, None, :],                 # (depth, 1, planes)
            params["ln_g"][:, None, :],               # (depth, 1, planes)
            params["ln_b"][:, None, :],               # (depth, 1, planes)
            params["bm"][:, None, None],              # (depth, 1, 1)
            params["wm"][:, None, :],                 # (depth, 1, C)
        ],
        axis=-1,
    ).astype(jnp.float32)                             # (depth, 1, 3*planes + 1 + C)

    # Grid: at most 2 fat steps -- keeps both v7x TensorCores busy while paying
    # at most one extra ~0.35us step on single-TC chips (v5e/v6e).
    G = 2 if (B % 2 == 0 and B >= 2) else 1
    BB = B // G

    out_flat = pl.pallas_call(
        _gc_layer_kernel,
        grid=(G,),
        in_specs=[
            pl.BlockSpec((BB, C, P), lambda g: (g, 0, 0)),                   # activations
            pl.BlockSpec((depth, C, 2 * planes + 1), lambda g: (0, 0, 0)),   # matrix pack
            pl.BlockSpec((depth, 1, 3 * planes + 1 + C), lambda g: (0, 0, 0)),  # vector pack
        ],
        out_specs=pl.BlockSpec((BB, C, P), lambda g: (g, 0, 0)),
        out_shape=jax.ShapeDtypeStruct((B, C, P), jnp.bfloat16),
        scratch_shapes=[pltpu.VMEM((BB, C, P), jnp.float32)],                # running x
        compiler_params=pltpu.CompilerParams(
            dimension_semantics=("parallel",),      # megacore shards the batch slabs
            vmem_limit_bytes=32 * 1024 * 1024,      # explicit; > v5e's 16 MiB default
        ),
    )(x_flat, wmat, wvec)

    return out_flat.reshape(B, C, H, W)


# ------------------------------------------------------------------ reference

def _ref_forward(x, params):
    """Pure-JAX f32 mirror of the PyTorch BasicLayer (att pooling, channel_add)."""
    B, C, H, W = x.shape
    depth = params["wm"].shape[0]
    out = x.astype(jnp.float32)
    for d in range(depth):
        logits = jnp.einsum("bchw,c->bhw", out, params["wm"][d]) + params["bm"][d]
        attn = jax.nn.softmax(logits.reshape(B, H * W), axis=-1)
        ctx = jnp.einsum("bcp,bp->bc", out.reshape(B, C, H * W), attn)   # (B, C)

        h = ctx @ params["w1"][d].T + params["b1"][d]                    # (B, planes)
        mu = h.mean(-1, keepdims=True)
        var = jnp.mean((h - mu) ** 2, axis=-1, keepdims=True)
        h = (h - mu) / jnp.sqrt(var + _LN_EPS)
        h = h * params["ln_g"][d] + params["ln_b"][d]
        h = jnp.maximum(h, 0.0)
        add = h @ params["w2"][d].T + params["b2"][d]                    # (B, C)

        out = out + add[:, :, None, None]
    return out


# ------------------------------------------------------------------ main

if __name__ == "__main__":
    # BasicLayer(dim=32, context_ratio=0.25, pooling_type='att',
    #            fusion_types=('channel_add',), depth=2, downsample=None)
    B, C, H, W = 2, 32, 16, 16
    depth = 2
    planes = int(C * 0.25)          # 8

    key = jax.random.PRNGKey(0)
    ks = jax.random.split(key, 9)
    s = 0.1
    params = {
        "wm":   jax.random.normal(ks[0], (depth, C), jnp.float32) * s,          # conv_mask w
        "bm":   jax.random.normal(ks[1], (depth,), jnp.float32) * s,            # conv_mask b
        "w1":   jax.random.normal(ks[2], (depth, planes, C), jnp.float32) * s,  # add conv1 w
        "b1":   jax.random.normal(ks[3], (depth, planes), jnp.float32) * s,     # add conv1 b
        "ln_g": 1.0 + jax.random.normal(ks[4], (depth, planes), jnp.float32) * s,
        "ln_b": jax.random.normal(ks[5], (depth, planes), jnp.float32) * s,
        "w2":   jax.random.normal(ks[6], (depth, C, planes), jnp.float32) * s,  # add conv2 w
        "b2":   jax.random.normal(ks[7], (depth, C), jnp.float32) * s,          # add conv2 b
    }
    x_f32 = jax.random.normal(ks[8], (B, C, H, W), jnp.float32)
    # Quantize the input to bf16 once, so the kernel and the f32 reference see
    # the same input; the remaining difference is only the kernel's bf16 output.
    x = x_f32.astype(jnp.bfloat16)

    out = jax.block_until_ready(basic_layer_forward(x, params))
    assert out.shape == (B, C, H, W), out.shape
    assert out.dtype == jnp.bfloat16, out.dtype

    ref = jax.block_until_ready(_ref_forward(x.astype(jnp.float32), params))
    out_f32 = out.astype(jnp.float32)
    max_err = float(jnp.abs(out_f32 - ref).max())
    assert jnp.allclose(out_f32, ref, atol=2e-2, rtol=2e-2), max_err

    print("KERNEL_OK")
</pallas_src>

<mosaic_0001>
module attributes {stable_mosaic.version = 11 : i64} {
  func.func @_gc_layer_kernel(%arg0: i32, %arg1: memref<1x32x256xbf16, #tpu.memory_space<vmem>>, %arg2: memref<2x32x17xf32, #tpu.memory_space<vmem>>, %arg3: memref<2x1x57xf32, #tpu.memory_space<vmem>>, %arg4: memref<1x32x256xbf16, #tpu.memory_space<vmem>>, %arg5: memref<1x32x256xf32, #tpu.memory_space<vmem>>) attributes {dimension_semantics = [#tpu.dimension_semantics<parallel>], iteration_bounds = array<i64: 2>, scalar_prefetch = 0 : i64, scratch_operands = 1 : i64, tpu.core_type = #tpu.core_type<tc>, window_params = [{transform_indices = @transform_0, window_bounds = array<i64: 1, 32, 256>}, {pipeline_mode = #tpu.pipeline_mode<synchronous>, transform_indices = @transform_1, window_bounds = array<i64: 2, 32, 17>}, {pipeline_mode = #tpu.pipeline_mode<synchronous>, transform_indices = @transform_2, window_bounds = array<i64: 2, 1, 57>}, {transform_indices = @transform_3, window_bounds = array<i64: 1, 32, 256>}]} {
    %c0 = arith.constant 0 : index
    %c0_0 = arith.constant 0 : index
    %c0_1 = arith.constant 0 : index
    %0 = vector.load %arg1[%c0, %c0_0, %c0_1] : memref<1x32x256xbf16, #tpu.memory_space<vmem>>, vector<1x32x256xbf16>
    %1 = arith.extf %0 : vector<1x32x256xbf16> to vector<1x32x256xf32>
    %c0_2 = arith.constant 0 : index
    %c0_3 = arith.constant 0 : index
    %c0_4 = arith.constant 0 : index
    %2 = vector.load %arg5[%c0_2, %c0_3, %c0_4] : memref<1x32x256xf32, #tpu.memory_space<vmem>>, vector<1x32x256xf32>
    tpu.vector_store %arg5[%c0_2, %c0_3, %c0_4], %1 {strides = array<i32>} : memref<1x32x256xf32, #tpu.memory_space<vmem>>, vector<1x32x256xf32>,
    %c0_5 = arith.constant 0 : index
    %c0_6 = arith.constant 0 : index
    %c0_7 = arith.constant 0 : index
    %3 = vector.load %arg2[%c0_5, %c0_6, %c0_7] : memref<2x32x17xf32, #tpu.memory_space<vmem>>, vector<1x32x8xf32>
    %4 = vector.shape_cast %3 : vector<1x32x8xf32> to vector<32x8xf32>
    %c0_8 = arith.constant 0 : index
    %c0_9 = arith.constant 0 : index
    %c8 = arith.constant 8 : index
    %5 = vector.load %arg2[%c0_8, %c0_9, %c8] : memref<2x32x17xf32, #tpu.memory_space<vmem>>, vector<1x32x8xf32>
    %6 = vector.shape_cast %5 : vector<1x32x8xf32> to vector<32x8xf32>
    %c0_10 = arith.constant 0 : index
    %c0_11 = arith.constant 0 : index
    %c16 = arith.constant 16 : index
    %7 = vector.load %arg2[%c0_10, %c0_11, %c16] : memref<2x32x17xf32, #tpu.memory_space<vmem>>, vector<1x32x1xf32>
    %8 = vector.shape_cast %7 : vector<1x32x1xf32> to vector<32x1xf32>
    %c0_12 = arith.constant 0 : index
    %c0_13 = arith.constant 0 : index
    %c0_14 = arith.constant 0 : index
    %9 = vector.load %arg3[%c0_12, %c0_13, %c0_14] : memref<2x1x57xf32, #tpu.memory_space<vmem>>, vector<1x1x8xf32>
    %10 = vector.shape_cast %9 : vector<1x1x8xf32> to vector<1x8xf32>
    %c0_15 = arith.constant 0 : index
    %c0_16 = arith.constant 0 : index
    %c8_17 = arith.constant 8 : index
    %11 = vector.load %arg3[%c0_15, %c0_16, %c8_17] : memref<2x1x57xf32, #tpu.memory_space<vmem>>, vector<1x1x8xf32>
    %12 = vector.shape_cast %11 : vector<1x1x8xf32> to vector<1x8xf32>
    %c0_18 = arith.constant 0 : index
    %c0_19 = arith.constant 0 : index
    %c16_20 = arith.constant 16 : index
    %13 = vector.load %arg3[%c0_18, %c0_19, %c16_20] : memref<2x1x57xf32, #tpu.memory_space<vmem>>, vector<1x1x8xf32>
    %14 = vector.shape_cast %13 : vector<1x1x8xf32> to vector<1x8xf32>
    %c0_21 = arith.constant 0 : index
    %c0_22 = arith.constant 0 : index
    %c24 = arith.constant 24 : index
    %15 = vector.load %arg3[%c0_21, %c0_22, %c24] : memref<2x1x57xf32, #tpu.memory_space<vmem>>, vector<1x1x1xf32>
    %16 = vector.shape_cast %15 : vector<1x1x1xf32> to vector<1x1xf32>
    %c0_23 = arith.constant 0 : index
    %c0_24 = arith.constant 0 : index
    %c25 = arith.constant 25 : index
    %17 = vector.load %arg3[%c0_23, %c0_24, %c25] : memref<2x1x57xf32, #tpu.memory_space<vmem>>, vector<1x1x32xf32>
    %18 = vector.shape_cast %17 : vector<1x1x32xf32> to vector<1x32xf32>
    %c0_25 = arith.constant 0 : index
    %c0_26 = arith.constant 0 : index
    %c0_27 = arith.constant 0 : index
    %19 = vector.load %arg5[%c0_25, %c0_26, %c0_27] : memref<1x32x256xf32, #tpu.memory_space<vmem>>, vector<1x32x256xf32>
    %20 = vector.shape_cast %19 : vector<1x32x256xf32> to vector<32x256xf32>
    %cst = arith.constant dense<0.000000e+00> : vector<1x256xf32>
    %21 = tpu.matmul %18, %20, %cst {dimension_numbers = #tpu.dot_dimension_numbers<[1], [0], [0], [1], [0, 0, 1, 1], [], []>, precision = #tpu.contract_precision<fp32>} : vector<1x32xf32>, vector<32x256xf32>, vector<1x256xf32> -> vector<1x256xf32>
    %22 = vector.broadcast %16 : vector<1x1xf32> to vector<1x256xf32>
    %23 = arith.addf %21, %22 : vector<1x256xf32>
    %cst_28 = arith.constant dense<0xFF800000> : vector<1xf32>
    %24 = vector.multi_reduction <maximumf>, %23, %cst_28 [1] : vector<1x256xf32> to vector<1xf32>
    %25 = vector.shape_cast %24 : vector<1xf32> to vector<1x1xf32>
    %26 = vector.broadcast %25 : vector<1x1xf32> to vector<1x256xf32>
    %27 = arith.subf %23, %26 : vector<1x256xf32>
    %28 = math.exp %27 : vector<1x256xf32>
    %cst_29 = arith.constant dense<0.000000e+00> : vector<1xf32>
    %29 = vector.multi_reduction <add>, %28, %cst_29 [1] : vector<1x256xf32> to vector<1xf32>
    %30 = vector.shape_cast %29 : vector<1xf32> to vector<1x1xf32>
    %31 = vector.broadcast %28 : vector<1x256xf32> to vector<32x256xf32>
    %32 = arith.mulf %20, %31 : vector<32x256xf32>
    %cst_30 = arith.constant dense<0.000000e+00> : vector<32xf32>
    %33 = vector.multi_reduction <add>, %32, %cst_30 [1] : vector<32x256xf32> to vector<32xf32>
    %34 = vector.shape_cast %33 : vector<32xf32> to vector<32x1xf32>
    %35 = tpu.reciprocal %30 {approx = true} : vector<1x1xf32> -> vector<1x1xf32>
    %36 = vector.broadcast %35 : vector<1x1xf32> to vector<32x1xf32>
    %37 = arith.mulf %34, %36 : vector<32x1xf32>
    %38 = vector.broadcast %37 : vector<32x1xf32> to vector<32x8xf32>
    %39 = arith.mulf %4, %38 : vector<32x8xf32>
    %cst_31 = arith.constant dense<0.000000e+00> : vector<8xf32>
    %40 = vector.multi_reduction <add>, %39, %cst_31 [0] : vector<32x8xf32> to vector<8xf32>
    %41 = vector.shape_cast %40 : vector<8xf32> to vector<1x8xf32>
    %42 = arith.addf %41, %10 : vector<1x8xf32>
    %cst_32 = arith.constant dense<0.000000e+00> : vector<1xf32>
    %43 = vector.multi_reduction <add>, %42, %cst_32 [1] : vector<1x8xf32> to vector<1xf32>
    %44 = vector.shape_cast %43 : vector<1xf32> to vector<1x1xf32>
    %cst_33 = arith.constant 8.000000e+00 : f32
    %45 = vector.broadcast %cst_33 : f32 to vector<1x1xf32>
    %46 = arith.divf %44, %45 : vector<1x1xf32>
    %47 = vector.broadcast %46 : vector<1x1xf32> to vector<1x8xf32>
    %48 = arith.subf %42, %47 : vector<1x8xf32>
    %49 = arith.mulf %48, %48 : vector<1x8xf32>
    %cst_34 = arith.constant dense<0.000000e+00> : vector<1xf32>
    %50 = vector.multi_reduction <add>, %49, %cst_34 [1] : vector<1x8xf32> to vector<1xf32>
    %51 = vector.shape_cast %50 : vector<1xf32> to vector<1x1xf32>
    %cst_35 = arith.constant 8.000000e+00 : f32
    %52 = vector.broadcast %cst_35 : f32 to vector<1x1xf32>
    %53 = arith.divf %51, %52 : vector<1x1xf32>
    %54 = vector.broadcast %46 : vector<1x1xf32> to vector<1x8xf32>
    %55 = arith.subf %42, %54 : vector<1x8xf32>
    %cst_36 = arith.constant 9.99999974E-6 : f32
    %56 = vector.broadcast %cst_36 : f32 to vector<1x1xf32>
    %57 = arith.addf %53, %56 : vector<1x1xf32>
    %58 = math.rsqrt %57 : vector<1x1xf32>
    %59 = vector.broadcast %58 : vector<1x1xf32> to vector<1x8xf32>
    %60 = arith.mulf %55, %59 : vector<1x8xf32>
    %61 = arith.mulf %60, %12 : vector<1x8xf32>
    %62 = arith.addf %61, %14 : vector<1x8xf32>
    %cst_37 = arith.constant 0.000000e+00 : f32
    %63 = vector.broadcast %cst_37 : f32 to vector<1x8xf32>
    %64 = arith.maximumf %62, %63 : vector<1x8xf32>
    %65 = vector.broadcast %64 : vector<1x8xf32> to vector<32x8xf32>
    %66 = arith.mulf %6, %65 : vector<32x8xf32>
    %cst_38 = arith.constant dense<0.000000e+00> : vector<32xf32>
    %67 = vector.multi_reduction <add>, %66, %cst_38 [1] : vector<32x8xf32> to vector<32xf32>
    %68 = vector.shape_cast %67 : vector<32xf32> to vector<32x1xf32>
    %69 = arith.addf %68, %8 : vector<32x1xf32>
    %70 = vector.broadcast %69 : vector<32x1xf32> to vector<32x256xf32>
    %71 = arith.addf %20, %70 : vector<32x256xf32>
    %c0_39 = arith.constant 0 : index
    %c0_40 = arith.constant 0 : index
    %c0_41 = arith.constant 0 : index
    %72 = vector.load %arg5[%c0_39, %c0_40, %c0_41] : memref<1x32x256xf32, #tpu.memory_space<vmem>>, vector<1x32x256xf32>
    %73 = vector.shape_cast %72 : vector<1x32x256xf32> to vector<32x256xf32>
    %74 = vector.shape_cast %71 : vector<32x256xf32> to vector<1x32x256xf32>
    tpu.vector_store %arg5[%c0_39, %c0_40, %c0_41], %74 {strides = array<i32>} : memref<1x32x256xf32, #tpu.memory_space<vmem>>, vector<1x32x256xf32>,
    %c1 = arith.constant 1 : index
    %c0_42 = arith.constant 0 : index
    %c0_43 = arith.constant 0 : index
    %75 = vector.load %arg2[%c1, %c0_42, %c0_43] : memref<2x32x17xf32, #tpu.memory_space<vmem>>, vector<1x32x8xf32>
    %76 = vector.shape_cast %75 : vector<1x32x8xf32> to vector<32x8xf32>
    %c1_44 = arith.constant 1 : index
    %c0_45 = arith.constant 0 : index
    %c8_46 = arith.constant 8 : index
    %77 = vector.load %arg2[%c1_44, %c0_45, %c8_46] : memref<2x32x17xf32, #tpu.memory_space<vmem>>, vector<1x32x8xf32>
    %78 = vector.shape_cast %77 : vector<1x32x8xf32> to vector<32x8xf32>
    %c1_47 = arith.constant 1 : index
    %c0_48 = arith.constant 0 : index
    %c16_49 = arith.constant 16 : index
    %79 = vector.load %arg2[%c1_47, %c0_48, %c16_49] : memref<2x32x17xf32, #tpu.memory_space<vmem>>, vector<1x32x1xf32>
    %80 = vector.shape_cast %79 : vector<1x32x1xf32> to vector<32x1xf32>
    %c1_50 = arith.constant 1 : index
    %c0_51 = arith.constant 0 : index
    %c0_52 = arith.constant 0 : index
    %81 = vector.load %arg3[%c1_50, %c0_51, %c0_52] : memref<2x1x57xf32, #tpu.memory_space<vmem>>, vector<1x1x8xf32>
    %82 = vector.shape_cast %81 : vector<1x1x8xf32> to vector<1x8xf32>
    %c1_53 = arith.constant 1 : index
    %c0_54 = arith.constant 0 : index
    %c8_55 = arith.constant 8 : index
    %83 = vector.load %arg3[%c1_53, %c0_54, %c8_55] : memref<2x1x57xf32, #tpu.memory_space<vmem>>, vector<1x1x8xf32>
    %84 = vector.shape_cast %83 : vector<1x1x8xf32> to vector<1x8xf32>
    %c1_56 = arith.constant 1 : index
    %c0_57 = arith.constant 0 : index
    %c16_58 = arith.constant 16 : index
    %85 = vector.load %arg3[%c1_56, %c0_57, %c16_58] : memref<2x1x57xf32, #tpu.memory_space<vmem>>, vector<1x1x8xf32>
    %86 = vector.shape_cast %85 : vector<1x1x8xf32> to vector<1x8xf32>
    %c1_59 = arith.constant 1 : index
    %c0_60 = arith.constant 0 : index
    %c24_61 = arith.constant 24 : index
    %87 = vector.load %arg3[%c1_59, %c0_60, %c24_61] : memref<2x1x57xf32, #tpu.memory_space<vmem>>, vector<1x1x1xf32>
    %88 = vector.shape_cast %87 : vector<1x1x1xf32> to vector<1x1xf32>
    %c1_62 = arith.constant 1 : index
    %c0_63 = arith.constant 0 : index
    %c25_64 = arith.constant 25 : index
    %89 = vector.load %arg3[%c1_62, %c0_63, %c25_64] : memref<2x1x57xf32, #tpu.memory_space<vmem>>, vector<1x1x32xf32>
    %90 = vector.shape_cast %89 : vector<1x1x32xf32> to vector<1x32xf32>
    %c0_65 = arith.constant 0 : index
    %c0_66 = arith.constant 0 : index
    %c0_67 = arith.constant 0 : index
    %91 = vector.load %arg5[%c0_65, %c0_66, %c0_67] : memref<1x32x256xf32, #tpu.memory_space<vmem>>, vector<1x32x256xf32>
    %92 = vector.shape_cast %91 : vector<1x32x256xf32> to vector<32x256xf32>
    %cst_68 = arith.constant dense<0.000000e+00> : vector<1x256xf32>
    %93 = tpu.matmul %90, %92, %cst_68 {dimension_numbers = #tpu.dot_dimension_numbers<[1], [0], [0], [1], [0, 0, 1, 1], [], []>, precision = #tpu.contract_precision<fp32>} : vector<1x32xf32>, vector<32x256xf32>, vector<1x256xf32> -> vector<1x256xf32>
    %94 = vector.broadcast %88 : vector<1x1xf32> to vector<1x256xf32>
    %95 = arith.addf %93, %94 : vector<1x256xf32>
    %cst_69 = arith.constant dense<0xFF800000> : vector<1xf32>
    %96 = vector.multi_reduction <maximumf>, %95, %cst_69 [1] : vector<1x256xf32> to vector<1xf32>
    %97 = vector.shape_cast %96 : vector<1xf32> to vector<1x1xf32>
    %98 = vector.broadcast %97 : vector<1x1xf32> to vector<1x256xf32>
    %99 = arith.subf %95, %98 : vector<1x256xf32>
    %100 = math.exp %99 : vector<1x256xf32>
    %cst_70 = arith.constant dense<0.000000e+00> : vector<1xf32>
    %101 = vector.multi_reduction <add>, %100, %cst_70 [1] : vector<1x256xf32> to vector<1xf32>
    %102 = vector.shape_cast %101 : vector<1xf32> to vector<1x1xf32>
    %103 = vector.broadcast %100 : vector<1x256xf32> to vector<32x256xf32>
    %104 = arith.mulf %92, %103 : vector<32x256xf32>
    %cst_71 = arith.constant dense<0.000000e+00> : vector<32xf32>
    %105 = vector.multi_reduction <add>, %104, %cst_71 [1] : vector<32x256xf32> to vector<32xf32>
    %106 = vector.shape_cast %105 : vector<32xf32> to vector<32x1xf32>
    %107 = tpu.reciprocal %102 {approx = true} : vector<1x1xf32> -> vector<1x1xf32>
    %108 = vector.broadcast %107 : vector<1x1xf32> to vector<32x1xf32>
    %109 = arith.mulf %106, %108 : vector<32x1xf32>
    %110 = vector.broadcast %109 : vector<32x1xf32> to vector<32x8xf32>
    %111 = arith.mulf %76, %110 : vector<32x8xf32>
    %cst_72 = arith.constant dense<0.000000e+00> : vector<8xf32>
    %112 = vector.multi_reduction <add>, %111, %cst_72 [0] : vector<32x8xf32> to vector<8xf32>
    %113 = vector.shape_cast %112 : vector<8xf32> to vector<1x8xf32>
    %114 = arith.addf %113, %82 : vector<1x8xf32>
    %cst_73 = arith.constant dense<0.000000e+00> : vector<1xf32>
    %115 = vector.multi_reduction <add>, %114, %cst_73 [1] : vector<1x8xf32> to vector<1xf32>
    %116 = vector.shape_cast %115 : vector<1xf32> to vector<1x1xf32>
    %cst_74 = arith.constant 8.000000e+00 : f32
    %117 = vector.broadcast %cst_74 : f32 to vector<1x1xf32>
    %118 = arith.divf %116, %117 : vector<1x1xf32>
    %119 = vector.broadcast %118 : vector<1x1xf32> to vector<1x8xf32>
    %120 = arith.subf %114, %119 : vector<1x8xf32>
    %121 = arith.mulf %120, %120 : vector<1x8xf32>
    %cst_75 = arith.constant dense<0.000000e+00> : vector<1xf32>
    %122 = vector.multi_reduction <add>, %121, %cst_75 [1] : vector<1x8xf32> to vector<1xf32>
    %123 = vector.shape_cast %122 : vector<1xf32> to vector<1x1xf32>
    %cst_76 = arith.constant 8.000000e+00 : f32
    %124 = vector.broadcast %cst_76 : f32 to vector<1x1xf32>
    %125 = arith.divf %123, %124 : vector<1x1xf32>
    %126 = vector.broadcast %118 : vector<1x1xf32> to vector<1x8xf32>
    %127 = arith.subf %114, %126 : vector<1x8xf32>
    %cst_77 = arith.constant 9.99999974E-6 : f32
    %128 = vector.broadcast %cst_77 : f32 to vector<1x1xf32>
    %129 = arith.addf %125, %128 : vector<1x1xf32>
    %130 = math.rsqrt %129 : vector<1x1xf32>
    %131 = vector.broadcast %130 : vector<1x1xf32> to vector<1x8xf32>
    %132 = arith.mulf %127, %131 : vector<1x8xf32>
    %133 = arith.mulf %132, %84 : vector<1x8xf32>
    %134 = arith.addf %133, %86 : vector<1x8xf32>
    %cst_78 = arith.constant 0.000000e+00 : f32
    %135 = vector.broadcast %cst_78 : f32 to vector<1x8xf32>
    %136 = arith.maximumf %134, %135 : vector<1x8xf32>
    %137 = vector.broadcast %136 : vector<1x8xf32> to vector<32x8xf32>
    %138 = arith.mulf %78, %137 : vector<32x8xf32>
    %cst_79 = arith.constant dense<0.000000e+00> : vector<32xf32>
    %139 = vector.multi_reduction <add>, %138, %cst_79 [1] : vector<32x8xf32> to vector<32xf32>
    %140 = vector.shape_cast %139 : vector<32xf32> to vector<32x1xf32>
    %141 = arith.addf %140, %80 : vector<32x1xf32>
    %142 = vector.broadcast %141 : vector<32x1xf32> to vector<32x256xf32>
    %143 = arith.addf %92, %142 : vector<32x256xf32>
    %c0_80 = arith.constant 0 : index
    %c0_81 = arith.constant 0 : index
    %c0_82 = arith.constant 0 : index
    %144 = vector.load %arg5[%c0_80, %c0_81, %c0_82] : memref<1x32x256xf32, #tpu.memory_space<vmem>>, vector<1x32x256xf32>
    %145 = vector.shape_cast %144 : vector<1x32x256xf32> to vector<32x256xf32>
    %146 = vector.shape_cast %143 : vector<32x256xf32> to vector<1x32x256xf32>
    tpu.vector_store %arg5[%c0_80, %c0_81, %c0_82], %146 {strides = array<i32>} : memref<1x32x256xf32, #tpu.memory_space<vmem>>, vector<1x32x256xf32>,
    %c0_83 = arith.constant 0 : index
    %c0_84 = arith.constant 0 : index
    %c0_85 = arith.constant 0 : index
    %147 = vector.load %arg5[%c0_83, %c0_84, %c0_85] : memref<1x32x256xf32, #tpu.memory_space<vmem>>, vector<1x32x256xf32>
    %148 = arith.truncf %147 : vector<1x32x256xf32> to vector<1x32x256xbf16>
    %c0_86 = arith.constant 0 : index
    %c0_87 = arith.constant 0 : index
    %c0_88 = arith.constant 0 : index
    %149 = vector.load %arg4[%c0_86, %c0_87, %c0_88] : memref<1x32x256xbf16, #tpu.memory_space<vmem>>, vector<1x32x256xbf16>
    tpu.vector_store %arg4[%c0_86, %c0_87, %c0_88], %148 {strides = array<i32>} : memref<1x32x256xbf16, #tpu.memory_space<vmem>>, vector<1x32x256xbf16>,
    return
  }
  func.func @transform_0(%arg0: i32) -> (i32, i32, i32) {
    %c0_i32 = arith.constant 0 : i32
    %c0_i32_0 = arith.constant 0 : i32
    %c0_i32_1 = arith.constant 0 : i32
    return %arg0, %c0_i32, %c0_i32_0 : i32, i32, i32
  }
  func.func @transform_1(%arg0: i32) -> (i32, i32, i32) {
    %c0_i32 = arith.constant 0 : i32
    %c0_i32_0 = arith.constant 0 : i32
    %c0_i32_1 = arith.constant 0 : i32
    %c0_i32_2 = arith.constant 0 : i32
    return %c0_i32, %c0_i32_0, %c0_i32_1 : i32, i32, i32
  }
  func.func @transform_2(%arg0: i32) -> (i32, i32, i32) {
    %c0_i32 = arith.constant 0 : i32
    %c0_i32_0 = arith.constant 0 : i32
    %c0_i32_1 = arith.constant 0 : i32
    %c0_i32_2 = arith.constant 0 : i32
    return %c0_i32, %c0_i32_0, %c0_i32_1 : i32, i32, i32
  }
  func.func @transform_3(%arg0: i32) -> (i32, i32, i32) {
    %c0_i32 = arith.constant 0 : i32
    %c0_i32_0 = arith.constant 0 : i32
    %c0_i32_1 = arith.constant 0 : i32
    return %arg0, %c0_i32, %c0_i32_0 : i32, i32, i32
  }
}

</mosaic_0001>

<llo_original>
// kernel: tpu_custom_call.1
$region0: #{tpu_custom_call.1}
  #allocation0 [shape = 'u32[]', space=smem, size = 0x4, offset = 0x4, fixed_abs, tag = 'smem constant byte address 0x4 - core index']
  #allocation1 [shape = 'u32[144,128]{1,0:T(1,128)}', space=vmem, size = 0x12000, scoped, tag = 'internal scratch']
  #allocation2 [shape = 'f32[1,32,256]{2,1,0:T(8,128)}', space=vmem, size = 0x8000, scoped, tag = 'scratch operand']
  %s0 = inlined_call_operand.vmem [shape: bf16[2,32,256], index: 0, kind: input, shape index: {}]
  %s1 = inlined_call_operand.vmem [shape: f32[2,32,17], index: 1, kind: input, shape index: {}]
  %s2 = inlined_call_operand.vmem [shape: f32[2,1,57], index: 2, kind: input, shape index: {}]
  %s3 = inlined_call_operand.hbm [shape: bf16[2,32,256], index: 3, kind: output, shape index: {}]
  %s4 = sld [smem:[#allocation0]]
  $region45: #{tpu_custom_call.1} parent=0
    _
  %s6 = ssub.s32 1, %s4
  %s7 = scalar_select 0, %s6, %s4
  $region1: #{tpu_custom_call.1} parent=0
    #allocation3 [shape = 'u8[32768]{0}', space=vmem, size = 0x8000, scoped, tag = 'output window, operand 0']
    #allocation4 [shape = 's32[2]{0}', space=sflag, size = 0x8, scoped, tag = 'scoped memory for tpu_custom_call.1']
    %8 = vsyncpa [#allocation4], 0
    %s9 = scalar_lea.sflag [#allocation4], 1
    %10 = vsyncpa %s9, 0
    loop: start=0, step=1, limit=4
    $region2: #{tpu_custom_call.1} parent=1 // loop_pre_header
      _
    $region3: #{tpu_custom_call.1} parent=1 // loop_header
      %s12 = sphi 0, %s16
      %p13 = scmp.ge.s32.totalorder %s12, 4
      %s22 = sphi 0, %s24
      %s25 = sphi 0, %s22
      %s26 = sphi 0, %s25
      %s42 = sphi 0, %s26
      %s46 = sphi 0, %s46
      %s48 = sphi 0, %s46
      %s49 = sphi 0, %s48
      %s63 = sphi 0, %s49
      %s67 = sphi 0, %s67
      %s69 = sphi 0, %s67
      %s70 = sphi 0, %s69
      %s84 = sphi 0, %s70
      %s90 = sphi 0, %s92
      %s93 = sphi 0, %s90
      %s94 = sphi 0, %s93
      %s110 = sphi 0, %s94
    $region4: #{tpu_custom_call.1} parent=1 // loop_header_branch
      %15 = sbr.rel (%p13) target = $region8
    $region5: #{tpu_custom_call.1} parent=1 // loop_body
      %s17 = ssub.s32 %s12, 1
      %s18 = ssub.s32 %s12, 2
      %s19 = sadd.s32 %s12, 1
      %s20 = ssub.s32 %s12, %s19
      %p21 = scmp.eq.s32.totalorder %s20, 0
      %s23 = sadd.s32 %s22, 1
      %s24 = scalar_select %p21, %s22, %s23
      %p27 = pneg %p21
      %p28 = scmp.eq.s32.totalorder %s12, 1
      %p29 = por %p27, %p28
      %p30 = scmp.ne.s32.totalorder %s22, %s25
      %p31 = scmp.eq.s32.totalorder %s12, 0
      %p32 = por %p30, %p31
      %p33 = scmp.ne.s32.totalorder %s22, %s25
      %p34 = scmp.eq.s32.totalorder %s17, 1
      %p35 = por %p33, %p34
      %p36 = scmp.ne.s32.totalorder %s25, %s26
      %p37 = scmp.eq.s32.totalorder %s17, 0
      %p38 = por %p36, %p37
      %p39 = scmp.ne.s32.totalorder %s25, %s26
      %p40 = scmp.eq.s32.totalorder %s18, 1
      %p41 = por %p39, %p40
      %p43 = scmp.ne.s32.totalorder %s26, %s42
      %p44 = scmp.eq.s32.totalorder %s18, 0
      %p45 = por %p43, %p44
      %s47 = sadd.s32 %s46, 1
      %p50 = scmp.eq.s32.totalorder %s12, 1
      %p51 = scmp.ne.s32.totalorder %s46, %s48
      %p52 = scmp.eq.s32.totalorder %s12, 0
      %p53 = por %p51, %p52
      %p54 = scmp.ne.s32.totalorder %s46, %s48
      %p55 = scmp.eq.s32.totalorder %s17, 1
      %p56 = por %p54, %p55
      %p57 = scmp.ne.s32.totalorder %s48, %s49
      %p58 = scmp.eq.s32.totalorder %s17, 0
      %p59 = por %p57, %p58
      %p60 = scmp.ne.s32.totalorder %s48, %s49
      %p61 = scmp.eq.s32.totalorder %s18, 1
      %p62 = por %p60, %p61
      %p64 = scmp.ne.s32.totalorder %s49, %s63
      %p65 = scmp.eq.s32.totalorder %s18, 0
      %p66 = por %p64, %p65
      %s68 = sadd.s32 %s67, 1
      %p71 = scmp.eq.s32.totalorder %s12, 1
      %p72 = scmp.ne.s32.totalorder %s67, %s69
      %p73 = scmp.eq.s32.totalorder %s12, 0
      %p74 = por %p72, %p73
      %p75 = scmp.ne.s32.totalorder %s67, %s69
      %p76 = scmp.eq.s32.totalorder %s17, 1
      %p77 = por %p75, %p76
      %p78 = scmp.ne.s32.totalorder %s69, %s70
      %p79 = scmp.eq.s32.totalorder %s17, 0
      %p80 = por %p78, %p79
      %p81 = scmp.ne.s32.totalorder %s69, %s70
      %p82 = scmp.eq.s32.totalorder %s18, 1
      %p83 = por %p81, %p82
      %p85 = scmp.ne.s32.totalorder %s70, %s84
      %p86 = scmp.eq.s32.totalorder %s18, 0
      %p87 = por %p85, %p86
      %s88 = ssub.s32 %s12, %s19
      %p89 = scmp.eq.s32.totalorder %s88, 0
      %s91 = sadd.s32 %s90, 1
      %s92 = scalar_select %p89, %s90, %s91
      %p95 = pneg %p89
      %p96 = scmp.eq.s32.totalorder %s12, 1
      %p97 = por %p95, %p96
      %p98 = scmp.ne.s32.totalorder %s90, %s93
      %p99 = scmp.eq.s32.totalorder %s12, 0
      %p100 = por %p98, %p99
      %p101 = scmp.ne.s32.totalorder %s90, %s93
      %p102 = scmp.eq.s32.totalorder %s17, 1
      %p103 = por %p101, %p102
      %p104 = scmp.ne.s32.totalorder %s93, %s94
      %p105 = scmp.eq.s32.totalorder %s17, 0
      %p106 = por %p104, %p105
      %p107 = scmp.ne.s32.totalorder %s93, %s94
      %p108 = scmp.eq.s32.totalorder %s18, 1
      %p109 = por %p107, %p108
      %p111 = scmp.ne.s32.totalorder %s94, %s110
      %p112 = scmp.eq.s32.totalorder %s18, 0
      %p113 = por %p111, %p112
      %p114 = scmp.le.s32.totalorder 1, %s12
      %p115 = scmp.lt.s32.totalorder %s12, 3
      %p116 = pnand %p114, %p115
      %p117 = pneg %p116
      // Predicated region
      $region9: #{tpu_custom_call.1} parent=5 // pred_check
        _
      $region10: #{tpu_custom_call.1} parent=5 // pred_check_branch
        %119 = sbr.rel (%p116) target = $region12
      $region11: #{tpu_custom_call.1} parent=5 // pred_region
        %s120 = ssub.s32 %s12, 1
        // Predicated region
        $region13: #{tpu_custom_call.1} parent=11 // pred_check
          %p121 = pneg %p59
        $region14: #{tpu_custom_call.1} parent=11 // pred_check_branch
          %123 = sbr.rel (%p121) target = $region16
        $region15: #{tpu_custom_call.1} parent=11 // pred_region
          _
        $region16: #{tpu_custom_call.1} parent=11 // pred_fallthru
          _
        // Predicated region
        $region17: #{tpu_custom_call.1} parent=11 // pred_check
          %p124 = pneg %p80
        $region18: #{tpu_custom_call.1} parent=11 // pred_check_branch
          %126 = sbr.rel (%p124) target = $region20
        $region19: #{tpu_custom_call.1} parent=11 // pred_region
          _
        $region20: #{tpu_custom_call.1} parent=11 // pred_fallthru
          _
      $region12: #{tpu_custom_call.1} parent=5 // pred_fallthru
        _
      %p127 = scmp.lt.s32.totalorder %s12, 2
      // Predicated region
      $region21: #{tpu_custom_call.1} parent=5 // pred_check
        %p128 = pneg %p127
      $region22: #{tpu_custom_call.1} parent=5 // pred_check_branch
        %130 = sbr.rel (%p128) target = $region24
      $region23: #{tpu_custom_call.1} parent=5 // pred_region
        // Predicated region
        $region25: #{tpu_custom_call.1} parent=23 // pred_check
          %p131 = pneg %p32
        $region26: #{tpu_custom_call.1} parent=23 // pred_check_branch
          %133 = sbr.rel (%p131) target = $region28
        $region27: #{tpu_custom_call.1} parent=23 // pred_region
          %p134 = scmp.lt.s32.totalorder %s12, 1
          %s135 = scalar_select %p134, %s12, 1
          %s136 = smul.addr %s135, 8
          %s137 = smul.addr %s136, 4
          %s138 = scalar_lea.vmem %s0, %s137
        $region28: #{tpu_custom_call.1} parent=23 // pred_fallthru
          _
      $region24: #{tpu_custom_call.1} parent=5 // pred_fallthru
        _
      %p139 = scmp.le.s32.totalorder 1, %s12
      %p140 = scmp.lt.s32.totalorder %s12, 3
      %p141 = pnand %p139, %p140
      %p142 = pneg %p141
      // Predicated region
      $region29: #{tpu_custom_call.1} parent=5 // pred_check
        _
      $region30: #{tpu_custom_call.1} parent=5 // pred_check_branch
        %144 = sbr.rel (%p141) target = $region32
      $region31: #{tpu_custom_call.1} parent=5 // pred_region
        %s145 = ssub.s32 %s12, 1
        %p146 = scmp.lt.s32.totalorder %s17, 1
        %s147 = scalar_select %p146, %s17, 1
        %s148 = smul.addr %s147, 8
        %s149 = smul.addr %s148, 4
        %s150 = scalar_lea.vmem %s0, %s149
        %p151 = pneg %p38
        %p152 = pneg %p35
        %p153 = pneg %p59
        %p154 = pneg %p56
        %p155 = pneg %p80
        %p156 = pneg %p77
        %p157 = pneg %p106
        %p158 = pneg %p103
        %s159 = sand.u32 %s93, 1
        %s160 = scalar_lea.sflag [#allocation4], %s159
        %s161 = sand.u32 %s93, 1
        %s162 = smul.addr %s161, 32
        %s163 = scalar_lea.vmem [#allocation3], %s162
        %p164 = scmp.lt.s32.totalorder %s17, 1
        %s165 = scalar_select %p164, %s17, 1
        %s166 = smul.addr %s165, 8
        %s167 = smul.addr %s166, 4
        %s168 = scalar_lea.vmem %s0, %s167
        %v169 = vld [vmem:[%s168] sm:$0xff]
        %v170 = vld [vmem:[%s168 + $0x8] sm:$0xff]
        %v171 = vld [vmem:[%s168 + $0x10] sm:$0xff]
        %v172 = vld [vmem:[%s168 + $0x18] sm:$0xff]
        %v173 = vunpack.c.l.bf16 %v169
        %v174 = vunpack.c.h.bf16 %v169
        %v175 = vunpack.c.l.bf16 %v170
        %v176 = vunpack.c.h.bf16 %v170
        %v177 = vunpack.c.l.bf16 %v171
        %v178 = vunpack.c.h.bf16 %v171
        %v179 = vunpack.c.l.bf16 %v172
        %v180 = vunpack.c.h.bf16 %v172
        %181 = vst [vmem:[#allocation2] sm:$0xff] %v173
        %182 = vst [vmem:[#allocation2 + $0x8] sm:$0xff] %v174
        %183 = vst [vmem:[#allocation2 + $0x10] sm:$0xff] %v175
        %184 = vst [vmem:[#allocation2 + $0x18] sm:$0xff] %v176
        %185 = vst [vmem:[#allocation2 + $0x20] sm:$0xff] %v177
        %186 = vst [vmem:[#allocation2 + $0x28] sm:$0xff] %v178
        %187 = vst [vmem:[#allocation2 + $0x30] sm:$0xff] %v179
        %188 = vst [vmem:[#allocation2 + $0x38] sm:$0xff] %v180
        %v189 = vld [vmem:[%s1] sm:$0xff]
        %v190 = vld [vmem:[%s1 + $0x8] sm:$0xff]
        %v191 = vld [vmem:[%s1 + $0x10] sm:$0xff]
        %v192 = vld [vmem:[%s1 + $0x18] sm:$0xff]
        %v193 = vld [vmem:[%s2] sm:$0x1]
        %v194 = vld [vmem:[#allocation2] sm:$0xff]
        %v195 = vld [vmem:[#allocation2 + $0x8] sm:$0xff]
        %v196 = vld [vmem:[#allocation2 + $0x10] sm:$0xff]
        %v197 = vld [vmem:[#allocation2 + $0x18] sm:$0xff]
        %v198 = vld [vmem:[#allocation2 + $0x20] sm:$0xff]
        %v199 = vld [vmem:[#allocation2 + $0x28] sm:$0xff]
        %v200 = vld [vmem:[#allocation2 + $0x30] sm:$0xff]
        %v201 = vld [vmem:[#allocation2 + $0x38] sm:$0xff]
        %203 = vset.pattern.permute.xlu0 24
        %204 = vperm.xlu0 %203, %v193
        %v205 = vpop.permute.xlu0 %204
        %v207 = vlaneseq
        %v208 = vshrl.u32 %v207, 7
        %v209 = vsub.s32 0, %v208
        %v210 = vrot.slane %v205, %v209
        %v211 = vlaneseq
        %v212 = vshrl.u32 %v211, 7
        %v213 = vsub.s32 0, %v212
        %v214 = vrot.slane %v193, %v213
        %215 = vrot.lane.b32.xlu0 %v214, 103
        %v216 = vpop.permute.xlu0 %215
        %vm217 = vcmask 261120
        %v218 = vsel %vm217, %v216, 0
        %v220 = vand.u32 %v195, 4294901760
        %221 = vmatprep.subr.mxu0 %v220
        %v222 = vand.u32 %v194, 4294901760
        %223 = vmatpush1.msra.mxu0 %v222
        %v224 = vand.u32 %v197, 4294901760
        %225 = vmatprep.subr.mxu0 %v224
        %v226 = vand.u32 %v196, 4294901760
        %227 = vmatpush1.msra.mxu0 %v226
        %v228 = vand.u32 %v199, 4294901760
        %229 = vmatprep.subr.mxu0 %v228
        %v230 = vand.u32 %v198, 4294901760
        %231 = vmatpush1.msra.mxu0 %v230
        %v232 = vand.u32 %v201, 4294901760
        %233 = vmatprep.subr.mxu0 %v232
        %v234 = vand.u32 %v200, 4294901760
        %235 = vmatpush1.msra.mxu0 %v234
        %236 = vmatprep.subr.mxu0 0.0
        %237 = vmatpush1.msra.mxu0 0.0
        %238 = vmatprep.subr.mxu0 0.0
        %239 = vmatpush1.msra.mxu0 0.0
        %240 = vmatprep.subr.mxu0 0.0
        %241 = vmatpush1.msra.mxu0 0.0
        %242 = vmatprep.subr.mxu0 0.0
        %243 = vmatpush1.msra.mxu0 0.0
        %244 = vmatprep.subr.mxu0 0.0
        %245 = vmatpush1.msra.mxu0 0.0
        %246 = vmatprep.subr.mxu0 0.0
        %247 = vmatpush1.msra.mxu0 0.0
        %248 = vmatprep.subr.mxu0 0.0
        %249 = vmatpush1.msra.mxu0 0.0
        %250 = vmatprep.subr.mxu0 0.0
        %251 = vmatpush1.msra.mxu0 0.0
        %252 = vmatprep.subr.mxu0 0.0
        %253 = vmatpush1.msra.mxu0 0.0
        %254 = vmatprep.subr.mxu0 0.0
        %255 = vmatpush1.msra.mxu0 0.0
        %256 = vmatprep.subr.mxu0 0.0
        %257 = vmatpush1.msra.mxu0 0.0
        %258 = vmatprep.subr.mxu0 0.0
        %259 = vmatpush1.msra.mxu0 0.0
        %260 = vmatprep.subr.mxu0 0.0
        %261 = vmatpush1.msra.mxu0 0.0
        %262 = vmatprep.subr.mxu0 0.0
        %263 = vmatpush1.msra.mxu0 0.0
        %264 = vmatprep.subr.mxu0 0.0
        %265 = vmatpush1.msra.mxu0 0.0
        %266 = vmatprep.subr.mxu0 0.0
        %267 = vmatpush1.msra.mxu0 0.0
        %268 = vmatprep.subr.mxu0 0.0
        %269 = vmatpush1.msra.mxu0 0.0
        %270 = vmatprep.subr.mxu0 0.0
        %271 = vmatpush1.msra.mxu0 0.0
        %272 = vmatprep.subr.mxu0 0.0
        %273 = vmatpush1.msra.mxu0 0.0
        %274 = vmatprep.subr.mxu0 0.0
        %275 = vmatpush1.msra.mxu0 0.0
        %276 = vmatprep.subr.mxu0 0.0
        %277 = vmatpush1.msra.mxu0 0.0
        %278 = vmatprep.subr.mxu0 0.0
        %279 = vmatpush1.msra.mxu0 0.0
        %280 = vmatprep.subr.mxu0 0.0
        %281 = vmatpush1.msra.mxu0 0.0
        %282 = vmatprep.subr.mxu0 0.0
        %283 = vmatpush1.msra.mxu0 0.0
        %284 = vmatprep.subr.mxu0 0.0
        %285 = vmatpush1.msra.mxu0 0.0
        %286 = vmatprep.subr.mxu0 0.0
        %287 = vmatpush1.msra.mxu0 0.0
        %288 = vmatprep.subr.mxu0 0.0
        %289 = vmatpush1.msra.mxu0 0.0
        %290 = vmatprep.subr.mxu0 0.0
        %291 = vmatpush1.msra.mxu0 0.0
        %292 = vmatprep.mubr.f32.mxu0 0.0
        %v293 = vand.u32 %v218, 4294901760
        %v294 = vsub.f32 %v218, %v293
        %v295 = vand.u32 %v294, 4294901760
        %v296 = vsub.f32 %v294, %v295
        %v297 = vand.u32 %v296, 4294901760
        %298 = vmatmul.mubr.f32.gmra.mrb[0].mxu0 %v297
        %v299 = vpop.f32.mrb[0].mxu0
        %v300 = vadd.f32 %v210, %v299
        %v301 = vpop.f32.mrb[0].mxu0
        %v302 = vadd.f32 %v210, %v301
        %303 = vdwg.mxu0
        %v304 = vand.u32 %v195, 4294901760
        %v305 = vsub.f32 %v195, %v304
        %v306 = vand.u32 %v305, 4294901760
        %v307 = vsub.f32 %v305, %v306
        %v308 = vand.u32 %v307, 4294901760
        %309 = vmatprep.subr.mxu0 %v308
        %v310 = vand.u32 %v194, 4294901760
        %v311 = vsub.f32 %v194, %v310
        %v312 = vand.u32 %v311, 4294901760
        %v313 = vsub.f32 %v311, %v312
        %v314 = vand.u32 %v313, 4294901760
        %315 = vmatpush1.msra.mxu0 %v314
        %v316 = vand.u32 %v197, 4294901760
        %v317 = vsub.f32 %v197, %v316
        %v318 = vand.u32 %v317, 4294901760
        %v319 = vsub.f32 %v317, %v318
        %v320 = vand.u32 %v319, 4294901760
        %321 = vmatprep.subr.mxu0 %v320
        %v322 = vand.u32 %v196, 4294901760
        %v323 = vsub.f32 %v196, %v322
        %v324 = vand.u32 %v323, 4294901760
        %v325 = vsub.f32 %v323, %v324
        %v326 = vand.u32 %v325, 4294901760
        %327 = vmatpush1.msra.mxu0 %v326
        %v328 = vand.u32 %v199, 4294901760
        %v329 = vsub.f32 %v199, %v328
        %v330 = vand.u32 %v329, 4294901760
        %v331 = vsub.f32 %v329, %v330
        %v332 = vand.u32 %v331, 4294901760
        %333 = vmatprep.subr.mxu0 %v332
        %v334 = vand.u32 %v198, 4294901760
        %v335 = vsub.f32 %v198, %v334
        %v336 = vand.u32 %v335, 4294901760
        %v337 = vsub.f32 %v335, %v336
        %v338 = vand.u32 %v337, 4294901760
        %339 = vmatpush1.msra.mxu0 %v338
        %v340 = vand.u32 %v201, 4294901760
        %v341 = vsub.f32 %v201, %v340
        %v342 = vand.u32 %v341, 4294901760
        %v343 = vsub.f32 %v341, %v342
        %v344 = vand.u32 %v343, 4294901760
        %345 = vmatprep.subr.mxu0 %v344
        %v346 = vand.u32 %v200, 4294901760
        %v347 = vsub.f32 %v200, %v346
        %v348 = vand.u32 %v347, 4294901760
        %v349 = vsub.f32 %v347, %v348
        %v350 = vand.u32 %v349, 4294901760
        %351 = vmatpush1.msra.mxu0 %v350
        %352 = vmatprep.subr.mxu0 0.0
        %353 = vmatpush1.msra.mxu0 0.0
        %354 = vmatprep.subr.mxu0 0.0
        %355 = vmatpush1.msra.mxu0 0.0
        %356 = vmatprep.subr.mxu0 0.0
        %357 = vmatpush1.msra.mxu0 0.0
        %358 = vmatprep.subr.mxu0 0.0
        %359 = vmatpush1.msra.mxu0 0.0
        %360 = vmatprep.subr.mxu0 0.0
        %361 = vmatpush1.msra.mxu0 0.0
        %362 = vmatprep.subr.mxu0 0.0
        %363 = vmatpush1.msra.mxu0 0.0
        %364 = vmatprep.subr.mxu0 0.0
        %365 = vmatpush1.msra.mxu0 0.0
        %366 = vmatprep.subr.mxu0 0.0
        %367 = vmatpush1.msra.mxu0 0.0
        %368 = vmatprep.subr.mxu0 0.0
        %369 = vmatpush1.msra.mxu0 0.0
        %370 = vmatprep.subr.mxu0 0.0
        %371 = vmatpush1.msra.mxu0 0.0
        %372 = vmatprep.subr.mxu0 0.0
        %373 = vmatpush1.msra.mxu0 0.0
        %374 = vmatprep.subr.mxu0 0.0
        %375 = vmatpush1.msra.mxu0 0.0
        %376 = vmatprep.subr.mxu0 0.0
        %377 = vmatpush1.msra.mxu0 0.0
        %378 = vmatprep.subr.mxu0 0.0
        %379 = vmatpush1.msra.mxu0 0.0
        %380 = vmatprep.subr.mxu0 0.0
        %381 = vmatpush1.msra.mxu0 0.0
        %382 = vmatprep.subr.mxu0 0.0
        %383 = vmatpush1.msra.mxu0 0.0
        %384 = vmatprep.subr.mxu0 0.0
        %385 = vmatpush1.msra.mxu0 0.0
        %386 = vmatprep.subr.mxu0 0.0
        %387 = vmatpush1.msra.mxu0 0.0
        %388 = vmatprep.subr.mxu0 0.0
        %389 = vmatpush1.msra.mxu0 0.0
        %390 = vmatprep.subr.mxu0 0.0
        %391 = vmatpush1.msra.mxu0 0.0
        %392 = vmatprep.subr.mxu0 0.0
        %393 = vmatpush1.msra.mxu0 0.0
        %394 = vmatprep.subr.mxu0 0.0
        %395 = vmatpush1.msra.mxu0 0.0
        %396 = vmatprep.subr.mxu0 0.0
        %397 = vmatpush1.msra.mxu0 0.0
        %398 = vmatprep.subr.mxu0 0.0
        %399 = vmatpush1.msra.mxu0 0.0
        %400 = vmatprep.subr.mxu0 0.0
        %401 = vmatpush1.msra.mxu0 0.0
        %402 = vmatprep.subr.mxu0 0.0
        %403 = vmatpush1.msra.mxu0 0.0
        %404 = vmatprep.subr.mxu0 0.0
        %405 = vmatpush1.msra.mxu0 0.0
        %406 = vmatprep.subr.mxu0 0.0
        %407 = vmatpush1.msra.mxu0 0.0
        %408 = vmatprep.mubr.f32.mxu0 0.0
        %v409 = vand.u32 %v218, 4294901760
        %410 = vmatmul.mubr.f32.gmra.mrb[0].mxu0 %v409
        %v411 = vpop.f32.mrb[0].mxu0
        %v412 = vadd.f32 %v300, %v411
        %v413 = vpop.f32.mrb[0].mxu0
        %v414 = vadd.f32 %v302, %v413
        %415 = vdwg.mxu0
        %v416 = vand.u32 %v195, 4294901760
        %v417 = vsub.f32 %v195, %v416
        %418 = vmatprep.subr.mxu0 %v417
        %v419 = vand.u32 %v194, 4294901760
        %v420 = vsub.f32 %v194, %v419
        %421 = vmatpush1.msra.mxu0 %v420
        %v422 = vand.u32 %v197, 4294901760
        %v423 = vsub.f32 %v197, %v422
        %424 = vmatprep.subr.mxu0 %v423
        %v425 = vand.u32 %v196, 4294901760
        %v426 = vsub.f32 %v196, %v425
        %427 = vmatpush1.msra.mxu0 %v426
        %v428 = vand.u32 %v199, 4294901760
        %v429 = vsub.f32 %v199, %v428
        %430 = vmatprep.subr.mxu0 %v429
        %v431 = vand.u32 %v198, 4294901760
        %v432 = vsub.f32 %v198, %v431
        %433 = vmatpush1.msra.mxu0 %v432
        %v434 = vand.u32 %v201, 4294901760
        %v435 = vsub.f32 %v201, %v434
        %436 = vmatprep.subr.mxu0 %v435
        %v437 = vand.u32 %v200, 4294901760
        %v438 = vsub.f32 %v200, %v437
        %439 = vmatpush1.msra.mxu0 %v438
        %440 = vmatprep.subr.mxu0 0.0
        %441 = vmatpush1.msra.mxu0 0.0
        %442 = vmatprep.subr.mxu0 0.0
        %443 = vmatpush1.msra.mxu0 0.0
        %444 = vmatprep.subr.mxu0 0.0
        %445 = vmatpush1.msra.mxu0 0.0
        %446 = vmatprep.subr.mxu0 0.0
        %447 = vmatpush1.msra.mxu0 0.0
        %448 = vmatprep.subr.mxu0 0.0
        %449 = vmatpush1.msra.mxu0 0.0
        %450 = vmatprep.subr.mxu0 0.0
        %451 = vmatpush1.msra.mxu0 0.0
        %452 = vmatprep.subr.mxu0 0.0
        %453 = vmatpush1.msra.mxu0 0.0
        %454 = vmatprep.subr.mxu0 0.0
        %455 = vmatpush1.msra.mxu0 0.0
        %456 = vmatprep.subr.mxu0 0.0
        %457 = vmatpush1.msra.mxu0 0.0
        %458 = vmatprep.subr.mxu0 0.0
        %459 = vmatpush1.msra.mxu0 0.0
        %460 = vmatprep.subr.mxu0 0.0
        %461 = vmatpush1.msra.mxu0 0.0
        %462 = vmatprep.subr.mxu0 0.0
        %463 = vmatpush1.msra.mxu0 0.0
        %464 = vmatprep.subr.mxu0 0.0
        %465 = vmatpush1.msra.mxu0 0.0
        %466 = vmatprep.subr.mxu0 0.0
        %467 = vmatpush1.msra.mxu0 0.0
        %468 = vmatprep.subr.mxu0 0.0
        %469 = vmatpush1.msra.mxu0 0.0
        %470 = vmatprep.subr.mxu0 0.0
        %471 = vmatpush1.msra.mxu0 0.0
        %472 = vmatprep.subr.mxu0 0.0
        %473 = vmatpush1.msra.mxu0 0.0
        %474 = vmatprep.subr.mxu0 0.0
        %475 = vmatpush1.msra.mxu0 0.0
        %476 = vmatprep.subr.mxu0 0.0
        %477 = vmatpush1.msra.mxu0 0.0
        %478 = vmatprep.subr.mxu0 0.0
        %479 = vmatpush1.msra.mxu0 0.0
        %480 = vmatprep.subr.mxu0 0.0
        %481 = vmatpush1.msra.mxu0 0.0
        %482 = vmatprep.subr.mxu0 0.0
        %483 = vmatpush1.msra.mxu0 0.0
        %484 = vmatprep.subr.mxu0 0.0
        %485 = vmatpush1.msra.mxu0 0.0
        %486 = vmatprep.subr.mxu0 0.0
        %487 = vmatpush1.msra.mxu0 0.0
        %488 = vmatprep.subr.mxu0 0.0
        %489 = vmatpush1.msra.mxu0 0.0
        %490 = vmatprep.subr.mxu0 0.0
        %491 = vmatpush1.msra.mxu0 0.0
        %492 = vmatprep.subr.mxu0 0.0
        %493 = vmatpush1.msra.mxu0 0.0
        %494 = vmatprep.subr.mxu0 0.0
        %495 = vmatpush1.msra.mxu0 0.0
        %496 = vmatprep.mubr.f32.mxu0 0.0
        %v497 = vand.u32 %v218, 4294901760
        %v498 = vsub.f32 %v218, %v497
        %499 = vmatmul.mubr.f32.gmra.mrb[0].mxu0 %v498
        %v500 = vpop.f32.mrb[0].mxu0
        %v501 = vadd.f32 %v412, %v500
        %v502 = vpop.f32.mrb[0].mxu0
        %v503 = vadd.f32 %v414, %v502
        %504 = vdwg.mxu0
        %v505 = vand.u32 %v195, 4294901760
        %506 = vmatprep.subr.mxu0 %v505
        %v507 = vand.u32 %v194, 4294901760
        %508 = vmatpush1.msra.mxu0 %v507
        %v509 = vand.u32 %v197, 4294901760
        %510 = vmatprep.subr.mxu0 %v509
        %v511 = vand.u32 %v196, 4294901760
        %512 = vmatpush1.msra.mxu0 %v511
        %v513 = vand.u32 %v199, 4294901760
        %514 = vmatprep.subr.mxu0 %v513
        %v515 = vand.u32 %v198, 4294901760
        %516 = vmatpush1.msra.mxu0 %v515
        %v517 = vand.u32 %v201, 4294901760
        %518 = vmatprep.subr.mxu0 %v517
        %v519 = vand.u32 %v200, 4294901760
        %520 = vmatpush1.msra.mxu0 %v519
        %521 = vmatprep.subr.mxu0 0.0
        %522 = vmatpush1.msra.mxu0 0.0
        %523 = vmatprep.subr.mxu0 0.0
        %524 = vmatpush1.msra.mxu0 0.0
        %525 = vmatprep.subr.mxu0 0.0
        %526 = vmatpush1.msra.mxu0 0.0
        %527 = vmatprep.subr.mxu0 0.0
        %528 = vmatpush1.msra.mxu0 0.0
        %529 = vmatprep.subr.mxu0 0.0
        %530 = vmatpush1.msra.mxu0 0.0
        %531 = vmatprep.subr.mxu0 0.0
        %532 = vmatpush1.msra.mxu0 0.0
        %533 = vmatprep.subr.mxu0 0.0
        %534 = vmatpush1.msra.mxu0 0.0
        %535 = vmatprep.subr.mxu0 0.0
        %536 = vmatpush1.msra.mxu0 0.0
        %537 = vmatprep.subr.mxu0 0.0
        %538 = vmatpush1.msra.mxu0 0.0
        %539 = vmatprep.subr.mxu0 0.0
        %540 = vmatpush1.msra.mxu0 0.0
        %541 = vmatprep.subr.mxu0 0.0
        %542 = vmatpush1.msra.mxu0 0.0
        %543 = vmatprep.subr.mxu0 0.0
        %544 = vmatpush1.msra.mxu0 0.0
        %545 = vmatprep.subr.mxu0 0.0
        %546 = vmatpush1.msra.mxu0 0.0
        %547 = vmatprep.subr.mxu0 0.0
        %548 = vmatpush1.msra.mxu0 0.0
        %549 = vmatprep.subr.mxu0 0.0
        %550 = vmatpush1.msra.mxu0 0.0
        %551 = vmatprep.subr.mxu0 0.0
        %552 = vmatpush1.msra.mxu0 0.0
        %553 = vmatprep.subr.mxu0 0.0
        %554 = vmatpush1.msra.mxu0 0.0
        %555 = vmatprep.subr.mxu0 0.0
        %556 = vmatpush1.msra.mxu0 0.0
        %557 = vmatprep.subr.mxu0 0.0
        %558 = vmatpush1.msra.mxu0 0.0
        %559 = vmatprep.subr.mxu0 0.0
        %560 = vmatpush1.msra.mxu0 0.0
        %561 = vmatprep.subr.mxu0 0.0
        %562 = vmatpush1.msra.mxu0 0.0
        %563 = vmatprep.subr.mxu0 0.0
        %564 = vmatpush1.msra.mxu0 0.0
        %565 = vmatprep.subr.mxu0 0.0
        %566 = vmatpush1.msra.mxu0 0.0
        %567 = vmatprep.subr.mxu0 0.0
        %568 = vmatpush1.msra.mxu0 0.0
        %569 = vmatprep.subr.mxu0 0.0
        %570 = vmatpush1.msra.mxu0 0.0
        %571 = vmatprep.subr.mxu0 0.0
        %572 = vmatpush1.msra.mxu0 0.0
        %573 = vmatprep.subr.mxu0 0.0
        %574 = vmatpush1.msra.mxu0 0.0
        %575 = vmatprep.subr.mxu0 0.0
        %576 = vmatpush1.msra.mxu0 0.0
        %577 = vmatprep.mubr.f32.mxu0 0.0
        %v578 = vand.u32 %v218, 4294901760
        %v579 = vsub.f32 %v218, %v578
        %v580 = vand.u32 %v579, 4294901760
        %581 = vmatmul.mubr.f32.gmra.mrb[0].mxu0 %v580
        %v582 = vpop.f32.mrb[0].mxu0
        %v583 = vadd.f32 %v501, %v582
        %v584 = vpop.f32.mrb[0].mxu0
        %v585 = vadd.f32 %v503, %v584
        %586 = vdwg.mxu0
        %v587 = vand.u32 %v195, 4294901760
        %v588 = vsub.f32 %v195, %v587
        %v589 = vand.u32 %v588, 4294901760
        %590 = vmatprep.subr.mxu0 %v589
        %v591 = vand.u32 %v194, 4294901760
        %v592 = vsub.f32 %v194, %v591
        %v593 = vand.u32 %v592, 4294901760
        %594 = vmatpush1.msra.mxu0 %v593
        %v595 = vand.u32 %v197, 4294901760
        %v596 = vsub.f32 %v197, %v595
        %v597 = vand.u32 %v596, 4294901760
        %598 = vmatprep.subr.mxu0 %v597
        %v599 = vand.u32 %v196, 4294901760
        %v600 = vsub.f32 %v196, %v599
        %v601 = vand.u32 %v600, 4294901760
        %602 = vmatpush1.msra.mxu0 %v601
        %v603 = vand.u32 %v199, 4294901760
        %v604 = vsub.f32 %v199, %v603
        %v605 = vand.u32 %v604, 4294901760
        %606 = vmatprep.subr.mxu0 %v605
        %v607 = vand.u32 %v198, 4294901760
        %v608 = vsub.f32 %v198, %v607
        %v609 = vand.u32 %v608, 4294901760
        %610 = vmatpush1.msra.mxu0 %v609
        %v611 = vand.u32 %v201, 4294901760
        %v612 = vsub.f32 %v201, %v611
        %v613 = vand.u32 %v612, 4294901760
        %614 = vmatprep.subr.mxu0 %v613
        %v615 = vand.u32 %v200, 4294901760
        %v616 = vsub.f32 %v200, %v615
        %v617 = vand.u32 %v616, 4294901760
        %618 = vmatpush1.msra.mxu0 %v617
        %619 = vmatprep.subr.mxu0 0.0
        %620 = vmatpush1.msra.mxu0 0.0
        %621 = vmatprep.subr.mxu0 0.0
        %622 = vmatpush1.msra.mxu0 0.0
        %623 = vmatprep.subr.mxu0 0.0
        %624 = vmatpush1.msra.mxu0 0.0
        %625 = vmatprep.subr.mxu0 0.0
        %626 = vmatpush1.msra.mxu0 0.0
        %627 = vmatprep.subr.mxu0 0.0
        %628 = vmatpush1.msra.mxu0 0.0
        %629 = vmatprep.subr.mxu0 0.0
        %630 = vmatpush1.msra.mxu0 0.0
        %631 = vmatprep.subr.mxu0 0.0
        %632 = vmatpush1.msra.mxu0 0.0
        %633 = vmatprep.subr.mxu0 0.0
        %634 = vmatpush1.msra.mxu0 0.0
        %635 = vmatprep.subr.mxu0 0.0
        %636 = vmatpush1.msra.mxu0 0.0
        %637 = vmatprep.subr.mxu0 0.0
        %638 = vmatpush1.msra.mxu0 0.0
        %639 = vmatprep.subr.mxu0 0.0
        %640 = vmatpush1.msra.mxu0 0.0
        %641 = vmatprep.subr.mxu0 0.0
        %642 = vmatpush1.msra.mxu0 0.0
        %643 = vmatprep.subr.mxu0 0.0
        %644 = vmatpush1.msra.mxu0 0.0
        %645 = vmatprep.subr.mxu0 0.0
        %646 = vmatpush1.msra.mxu0 0.0
        %647 = vmatprep.subr.mxu0 0.0
        %648 = vmatpush1.msra.mxu0 0.0
        %649 = vmatprep.subr.mxu0 0.0
        %650 = vmatpush1.msra.mxu0 0.0
        %651 = vmatprep.subr.mxu0 0.0
        %652 = vmatpush1.msra.mxu0 0.0
        %653 = vmatprep.subr.mxu0 0.0
        %654 = vmatpush1.msra.mxu0 0.0
        %655 = vmatprep.subr.mxu0 0.0
        %656 = vmatpush1.msra.mxu0 0.0
        %657 = vmatprep.subr.mxu0 0.0
        %658 = vmatpush1.msra.mxu0 0.0
        %659 = vmatprep.subr.mxu0 0.0
        %660 = vmatpush1.msra.mxu0 0.0
        %661 = vmatprep.subr.mxu0 0.0
        %662 = vmatpush1.msra.mxu0 0.0
        %663 = vmatprep.subr.mxu0 0.0
        %664 = vmatpush1.msra.mxu0 0.0
        %665 = vmatprep.subr.mxu0 0.0
        %666 = vmatpush1.msra.mxu0 0.0
        %667 = vmatprep.subr.mxu0 0.0
        %668 = vmatpush1.msra.mxu0 0.0
        %669 = vmatprep.subr.mxu0 0.0
        %670 = vmatpush1.msra.mxu0 0.0
        %671 = vmatprep.subr.mxu0 0.0
        %672 = vmatpush1.msra.mxu0 0.0
        %673 = vmatprep.subr.mxu0 0.0
        %674 = vmatpush1.msra.mxu0 0.0
        %675 = vmatprep.mubr.f32.mxu0 0.0
        %v676 = vand.u32 %v218, 4294901760
        %677 = vmatmul.mubr.f32.gmra.mrb[0].mxu0 %v676
        %v678 = vpop.f32.mrb[0].mxu0
        %v679 = vadd.f32 %v583, %v678
        %v680 = vpop.f32.mrb[0].mxu0
        %v681 = vadd.f32 %v585, %v680
        %682 = vdwg.mxu0
        %v683 = vand.u32 %v195, 4294901760
        %684 = vmatprep.subr.mxu0 %v683
        %v685 = vand.u32 %v194, 4294901760
        %686 = vmatpush1.msra.mxu0 %v685
        %v687 = vand.u32 %v197, 4294901760
        %688 = vmatprep.subr.mxu0 %v687
        %v689 = vand.u32 %v196, 4294901760
        %690 = vmatpush1.msra.mxu0 %v689
        %v691 = vand.u32 %v199, 4294901760
        %692 = vmatprep.subr.mxu0 %v691
        %v693 = vand.u32 %v198, 4294901760
        %694 = vmatpush1.msra.mxu0 %v693
        %v695 = vand.u32 %v201, 4294901760
        %696 = vmatprep.subr.mxu0 %v695
        %v697 = vand.u32 %v200, 4294901760
        %698 = vmatpush1.msra.mxu0 %v697
        %699 = vmatprep.subr.mxu0 0.0
        %700 = vmatpush1.msra.mxu0 0.0
        %701 = vmatprep.subr.mxu0 0.0
        %702 = vmatpush1.msra.mxu0 0.0
        %703 = vmatprep.subr.mxu0 0.0
        %704 = vmatpush1.msra.mxu0 0.0
        %705 = vmatprep.subr.mxu0 0.0
        %706 = vmatpush1.msra.mxu0 0.0
        %707 = vmatprep.subr.mxu0 0.0
        %708 = vmatpush1.msra.mxu0 0.0
        %709 = vmatprep.subr.mxu0 0.0
        %710 = vmatpush1.msra.mxu0 0.0
        %711 = vmatprep.subr.mxu0 0.0
        %712 = vmatpush1.msra.mxu0 0.0
        %713 = vmatprep.subr.mxu0 0.0
        %714 = vmatpush1.msra.mxu0 0.0
        %715 = vmatprep.subr.mxu0 0.0
        %716 = vmatpush1.msra.mxu0 0.0
        %717 = vmatprep.subr.mxu0 0.0
        %718 = vmatpush1.msra.mxu0 0.0
        %719 = vmatprep.subr.mxu0 0.0
        %720 = vmatpush1.msra.mxu0 0.0
        %721 = vmatprep.subr.mxu0 0.0
        %722 = vmatpush1.msra.mxu0 0.0
        %723 = vmatprep.subr.mxu0 0.0
        %724 = vmatpush1.msra.mxu0 0.0
        %725 = vmatprep.subr.mxu0 0.0
        %726 = vmatpush1.msra.mxu0 0.0
        %727 = vmatprep.subr.mxu0 0.0
        %728 = vmatpush1.msra.mxu0 0.0
        %729 = vmatprep.subr.mxu0 0.0
        %730 = vmatpush1.msra.mxu0 0.0
        %731 = vmatprep.subr.mxu0 0.0
        %732 = vmatpush1.msra.mxu0 0.0
        %733 = vmatprep.subr.mxu0 0.0
        %734 = vmatpush1.msra.mxu0 0.0
        %735 = vmatprep.subr.mxu0 0.0
        %736 = vmatpush1.msra.mxu0 0.0
        %737 = vmatprep.subr.mxu0 0.0
        %738 = vmatpush1.msra.mxu0 0.0
        %739 = vmatprep.subr.mxu0 0.0
        %740 = vmatpush1.msra.mxu0 0.0
        %741 = vmatprep.subr.mxu0 0.0
        %742 = vmatpush1.msra.mxu0 0.0
        %743 = vmatprep.subr.mxu0 0.0
        %744 = vmatpush1.msra.mxu0 0.0
        %745 = vmatprep.subr.mxu0 0.0
        %746 = vmatpush1.msra.mxu0 0.0
        %747 = vmatprep.subr.mxu0 0.0
        %748 = vmatpush1.msra.mxu0 0.0
        %749 = vmatprep.subr.mxu0 0.0
        %750 = vmatpush1.msra.mxu0 0.0
        %751 = vmatprep.subr.mxu0 0.0
        %752 = vmatpush1.msra.mxu0 0.0
        %753 = vmatprep.subr.mxu0 0.0
        %754 = vmatpush1.msra.mxu0 0.0
        %755 = vmatprep.mubr.f32.mxu0 0.0
        %v756 = vand.u32 %v218, 4294901760
        %757 = vmatmul.mubr.f32.gmra.mrb[0].mxu0 %v756
        %v758 = vpop.f32.mrb[0].mxu0
        %v759 = vadd.f32 %v679, %v758
        %v760 = vpop.f32.mrb[0].mxu0
        %v761 = vadd.f32 %v681, %v760
        %762 = vdwg.mxu0
        %vm763 = vcmask 1040384
        %v764 = vsel %vm763, %v759, -inf
        %v765 = vsel %vm763, %v761, -inf
        %v766 = vmax.f32 %v764, %v765
        %767 = vmax.xlane.f32.xlu0 %v766
        %v768 = vpop.xlane.xlu0 %767
        %v769 = vsub.f32 %v759, %v768
        %v770 = vsub.f32 %v761, %v768
        %v771 = vmul.f32 %v769, 1.442695
        %v772 = vpow.pop %v771
        %v773 = vmul.f32 %v770, 1.442695
        %v774 = vpow.pop %v773
        %v775 = vsel %vm763, %v772, 0.0
        %v776 = vsel %vm763, %v774, 0.0
        %v777 = vadd.f32 %v775, %v776
        %778 = vadd.xlane.f32.xlu0 %v777
        %v779 = vpop.xlane.xlu0 %778
        %v780 = vlaneseq
        %v781 = vshrl.u32 %v780, 7
        %v782 = vsub.s32 0, %v781
        %v783 = vrot.slane %v772, %v782
        %v784 = vlaneseq
        %v785 = vshrl.u32 %v784, 7
        %v786 = vsub.s32 0, %v785
        %v787 = vrot.slane %v774, %v786
        %v788 = vmul.f32 %v194, %v783
        %v789 = vmul.f32 %v195, %v787
        %v790 = vmul.f32 %v196, %v783
        %v791 = vmul.f32 %v197, %v787
        %v792 = vmul.f32 %v198, %v783
        %v793 = vmul.f32 %v199, %v787
        %v794 = vmul.f32 %v200, %v783
        %v795 = vmul.f32 %v201, %v787
        %v796 = vadd.f32 %v788, %v789
        %797 = vadd.xlane.f32.xlu0 %v796
        %v798 = vpop.xlane.xlu0 %797
        %v799 = vadd.f32 %v790, %v791
        %800 = vadd.xlane.f32.xlu0 %v799
        %v801 = vpop.xlane.xlu0 %800
        %v802 = vadd.f32 %v792, %v793
        %803 = vadd.xlane.f32.xlu0 %v802
        %v804 = vpop.xlane.xlu0 %803
        %v805 = vadd.f32 %v794, %v795
        %806 = vadd.xlane.f32.xlu0 %v805
        %v807 = vpop.xlane.xlu0 %806
        %v808 = vrcp.pop %v779
        %v809 = vlaneseq
        %v810 = vshrl.u32 %v809, 7
        %v811 = vsub.s32 0, %v810
        %v812 = vrot.slane %v808, %v811
        %v813 = vmul.f32 %v798, %v812
        %v814 = vmul.f32 %v801, %v812
        %v815 = vmul.f32 %v804, %v812
        %v816 = vmul.f32 %v807, %v812
        %v817 = vmul.f32 %v189, %v813
        %v818 = vmul.f32 %v190, %v814
        %v819 = vmul.f32 %v191, %v815
        %v820 = vmul.f32 %v192, %v816
        %vm821 = vcmask 64512
        %v822 = vsel %vm821, %v817, 0.0
        %v823 = vsel %vm821, %v818, 0.0
        %v824 = vadd.f32 %v822, %v823
        %v825 = vsel %vm821, %v819, 0.0
        %v826 = vadd.f32 %v824, %v825
        %v827 = vsel %vm821, %v820, 0.0
        %v828 = vadd.f32 %v826, %v827
        %v829 = vrot.slane %v828, 4
        %v830 = vadd.f32 %v828, %v829
        %v831 = vrot.slane %v830, 2
        %v832 = vadd.f32 %v830, %v831
        %v833 = vrot.slane %v832, 1
        %v834 = vadd.f32 %v832, %v833
        %v835 = vadd.f32 %v834, %v193
        %vm836 = vcmask 57344
        %v837 = vsel %vm836, %v835, 0.0
        %838 = vadd.xlane.f32.xlu0 %v837
        %v839 = vpop.xlane.xlu0 %838
        %v840 = vrcp.pop 8.0
        %v841 = vmul.f32 %v839, %v840
        %v842 = vsub.f32 %v835, %v841
        %v843 = vmul.f32 %v842, %v842
        %v844 = vsel %vm836, %v843, 0.0
        %845 = vadd.xlane.f32.xlu0 %v844
        %v846 = vpop.xlane.xlu0 %845
        %v847 = vmul.f32 %v846, %v840
        %v848 = vadd.f32 %v847, 1e-05
        %v849 = vrsqrt.pop %v848
        %v850 = vmul.f32 %v842, %v849
        %851 = vrot.lane.b32.xlu0 %v214, 120
        %v852 = vpop.permute.xlu0 %851
        %v854 = vmul.f32 %v850, %v852
        %855 = vrot.lane.b32.xlu0 %v214, 112
        %v856 = vpop.permute.xlu0 %855
        %v858 = vadd.f32 %v854, %v856
        %v859 = vmax.f32 %v858, 0.0
        %v860 = vlaneseq
        %v861 = vshrl.u32 %v860, 7
        %v862 = vsub.s32 0, %v861
        %v863 = vrot.slane %v859, %v862
        %865 = vrot.lane.b32.xlu0 %v863, 8
        %v866 = vpop.permute.xlu0 %865
        %v868 = vmul.f32 %v189, %v866
        %v869 = vmul.f32 %v190, %v866
        %v870 = vmul.f32 %v191, %v866
        %v871 = vmul.f32 %v192, %v866
        %876 = vrot.lane.b32.xlu0 %v868, 120
        %v877 = vpop.permute.xlu0 %876
        %878 = vrot.lane.b32.xlu0 %v869, 120
        %v879 = vpop.permute.xlu0 %878
        %880 = vrot.lane.b32.xlu0 %v870, 120
        %v881 = vpop.permute.xlu0 %880
        %882 = vrot.lane.b32.xlu0 %v871, 120
        %v883 = vpop.permute.xlu0 %882
        %v888 = vsel %vm821, %v877, 0.0
        %889 = vadd.xlane.f32.xlu0 %v888
        %v890 = vpop.xlane.xlu0 %889
        %v891 = vsel %vm821, %v879, 0.0
        %892 = vadd.xlane.f32.xlu0 %v891
        %v893 = vpop.xlane.xlu0 %892
        %v894 = vsel %vm821, %v881, 0.0
        %895 = vadd.xlane.f32.xlu0 %v894
        %v896 = vpop.xlane.xlu0 %895
        %v897 = vsel %vm821, %v883, 0.0
        %898 = vadd.xlane.f32.xlu0 %v897
        %v899 = vpop.xlane.xlu0 %898
        %v900 = vadd.f32 %v890, %v189
        %v901 = vadd.f32 %v893, %v190
        %v902 = vadd.f32 %v896, %v191
        %v903 = vadd.f32 %v899, %v192
        %905 = vset.pattern.permute.xlu0 16
        %906 = vperm.xlu0 %905, %v900
        %v907 = vpop.permute.xlu0 %906
        %910 = vset.pattern.permute.xlu0 16
        %911 = vperm.xlu0 %910, %v901
        %v912 = vpop.permute.xlu0 %911
        %915 = vset.pattern.permute.xlu0 16
        %916 = vperm.xlu0 %915, %v902
        %v917 = vpop.permute.xlu0 %916
        %920 = vset.pattern.permute.xlu0 16
        %921 = vperm.xlu0 %920, %v903
        %v922 = vpop.permute.xlu0 %921
        %v924 = vadd.f32 %v194, %v907
        %v925 = vadd.f32 %v195, %v907
        %v926 = vadd.f32 %v196, %v912
        %v927 = vadd.f32 %v197, %v912
        %v928 = vadd.f32 %v198, %v917
        %v929 = vadd.f32 %v199, %v917
        %v930 = vadd.f32 %v200, %v922
        %v931 = vadd.f32 %v201, %v922
        %932 = vst [vmem:[#allocation2] sm:$0xff] %v924
        %933 = vst [vmem:[#allocation2 + $0x8] sm:$0xff] %v925
        %934 = vst [vmem:[#allocation2 + $0x10] sm:$0xff] %v926
        %935 = vst [vmem:[#allocation2 + $0x18] sm:$0xff] %v927
        %936 = vst [vmem:[#allocation2 + $0x20] sm:$0xff] %v928
        %937 = vst [vmem:[#allocation2 + $0x28] sm:$0xff] %v929
        %938 = vst [vmem:[#allocation2 + $0x30] sm:$0xff] %v930
        %939 = vst [vmem:[#allocation2 + $0x38] sm:$0xff] %v931
        %s940 = scalar_lea.vmem %s1, 32
        %v941 = vld [vmem:[%s940] sm:$0xff]
        %v942 = vld [vmem:[%s940 + $0x8] sm:$0xff]
        %v943 = vld [vmem:[%s940 + $0x10] sm:$0xff]
        %v944 = vld [vmem:[%s940 + $0x18] sm:$0xff]
        %s945 = scalar_lea.vmem %s2, 1
        %v946 = vld [vmem:[%s945] sm:$0x1]
        %v947 = vld [vmem:[#allocation2] sm:$0xff]
        %v948 = vld [vmem:[#allocation2 + $0x8] sm:$0xff]
        %v949 = vld [vmem:[#allocation2 + $0x10] sm:$0xff]
        %v950 = vld [vmem:[#allocation2 + $0x18] sm:$0xff]
        %v951 = vld [vmem:[#allocation2 + $0x20] sm:$0xff]
        %v952 = vld [vmem:[#allocation2 + $0x28] sm:$0xff]
        %v953 = vld [vmem:[#allocation2 + $0x30] sm:$0xff]
        %v954 = vld [vmem:[#allocation2 + $0x38] sm:$0xff]
        %956 = vset.pattern.permute.xlu0 24
        %957 = vperm.xlu0 %956, %v946
        %v958 = vpop.permute.xlu0 %957
        %v960 = vlaneseq
        %v961 = vshrl.u32 %v960, 7
        %v962 = vsub.s32 0, %v961
        %v963 = vrot.slane %v958, %v962
        %v964 = vlaneseq
        %v965 = vshrl.u32 %v964, 7
        %v966 = vsub.s32 0, %v965
        %v967 = vrot.slane %v946, %v966
        %968 = vrot.lane.b32.xlu0 %v967, 103
        %v969 = vpop.permute.xlu0 %968
        %v970 = vsel %vm217, %v969, 0
        %v972 = vand.u32 %v948, 4294901760
        %973 = vmatprep.subr.mxu0 %v972
        %v974 = vand.u32 %v947, 4294901760
        %975 = vmatpush1.msra.mxu0 %v974
        %v976 = vand.u32 %v950, 4294901760
        %977 = vmatprep.subr.mxu0 %v976
        %v978 = vand.u32 %v949, 4294901760
        %979 = vmatpush1.msra.mxu0 %v978
        %v980 = vand.u32 %v952, 4294901760
        %981 = vmatprep.subr.mxu0 %v980
        %v982 = vand.u32 %v951, 4294901760
        %983 = vmatpush1.msra.mxu0 %v982
        %v984 = vand.u32 %v954, 4294901760
        %985 = vmatprep.subr.mxu0 %v984
        %v986 = vand.u32 %v953, 4294901760
        %987 = vmatpush1.msra.mxu0 %v986
        %988 = vmatprep.subr.mxu0 0.0
        %989 = vmatpush1.msra.mxu0 0.0
        %990 = vmatprep.subr.mxu0 0.0
        %991 = vmatpush1.msra.mxu0 0.0
        %992 = vmatprep.subr.mxu0 0.0
        %993 = vmatpush1.msra.mxu0 0.0
        %994 = vmatprep.subr.mxu0 0.0
        %995 = vmatpush1.msra.mxu0 0.0
        %996 = vmatprep.subr.mxu0 0.0
        %997 = vmatpush1.msra.mxu0 0.0
        %998 = vmatprep.subr.mxu0 0.0
        %999 = vmatpush1.msra.mxu0 0.0
        %1000 = vmatprep.subr.mxu0 0.0
        %1001 = vmatpush1.msra.mxu0 0.0
        %1002 = vmatprep.subr.mxu0 0.0
        %1003 = vmatpush1.msra.mxu0 0.0
        %1004 = vmatprep.subr.mxu0 0.0
        %1005 = vmatpush1.msra.mxu0 0.0
        %1006 = vmatprep.subr.mxu0 0.0
        %1007 = vmatpush1.msra.mxu0 0.0
        %1008 = vmatprep.subr.mxu0 0.0
        %1009 = vmatpush1.msra.mxu0 0.0
        %1010 = vmatprep.subr.mxu0 0.0
        %1011 = vmatpush1.msra.mxu0 0.0
        %1012 = vmatprep.subr.mxu0 0.0
        %1013 = vmatpush1.msra.mxu0 0.0
        %1014 = vmatprep.subr.mxu0 0.0
        %1015 = vmatpush1.msra.mxu0 0.0
        %1016 = vmatprep.subr.mxu0 0.0
        %1017 = vmatpush1.msra.mxu0 0.0
        %1018 = vmatprep.subr.mxu0 0.0
        %1019 = vmatpush1.msra.mxu0 0.0
        %1020 = vmatprep.subr.mxu0 0.0
        %1021 = vmatpush1.msra.mxu0 0.0
        %1022 = vmatprep.subr.mxu0 0.0
        %1023 = vmatpush1.msra.mxu0 0.0
        %1024 = vmatprep.subr.mxu0 0.0
        %1025 = vmatpush1.msra.mxu0 0.0
        %1026 = vmatprep.subr.mxu0 0.0
        %1027 = vmatpush1.msra.mxu0 0.0
        %1028 = vmatprep.subr.mxu0 0.0
        %1029 = vmatpush1.msra.mxu0 0.0
        %1030 = vmatprep.subr.mxu0 0.0
        %1031 = vmatpush1.msra.mxu0 0.0
        %1032 = vmatprep.subr.mxu0 0.0
        %1033 = vmatpush1.msra.mxu0 0.0
        %1034 = vmatprep.subr.mxu0 0.0
        %1035 = vmatpush1.msra.mxu0 0.0
        %1036 = vmatprep.subr.mxu0 0.0
        %1037 = vmatpush1.msra.mxu0 0.0
        %1038 = vmatprep.subr.mxu0 0.0
        %1039 = vmatpush1.msra.mxu0 0.0
        %1040 = vmatprep.subr.mxu0 0.0
        %1041 = vmatpush1.msra.mxu0 0.0
        %1042 = vmatprep.subr.mxu0 0.0
        %1043 = vmatpush1.msra.mxu0 0.0
        %1044 = vmatprep.mubr.f32.mxu0 0.0
        %v1045 = vand.u32 %v970, 4294901760
        %v1046 = vsub.f32 %v970, %v1045
        %v1047 = vand.u32 %v1046, 4294901760
        %v1048 = vsub.f32 %v1046, %v1047
        %v1049 = vand.u32 %v1048, 4294901760
        %1050 = vmatmul.mubr.f32.gmra.mrb[0].mxu0 %v1049
        %v1051 = vpop.f32.mrb[0].mxu0
        %v1052 = vadd.f32 %v963, %v1051
        %v1053 = vpop.f32.mrb[0].mxu0
        %v1054 = vadd.f32 %v963, %v1053
        %1055 = vdwg.mxu0
        %v1056 = vand.u32 %v948, 4294901760
        %v1057 = vsub.f32 %v948, %v1056
        %v1058 = vand.u32 %v1057, 4294901760
        %v1059 = vsub.f32 %v1057, %v1058
        %v1060 = vand.u32 %v1059, 4294901760
        %1061 = vmatprep.subr.mxu0 %v1060
        %v1062 = vand.u32 %v947, 4294901760
        %v1063 = vsub.f32 %v947, %v1062
        %v1064 = vand.u32 %v1063, 4294901760
        %v1065 = vsub.f32 %v1063, %v1064
        %v1066 = vand.u32 %v1065, 4294901760
        %1067 = vmatpush1.msra.mxu0 %v1066
        %v1068 = vand.u32 %v950, 4294901760
        %v1069 = vsub.f32 %v950, %v1068
        %v1070 = vand.u32 %v1069, 4294901760
        %v1071 = vsub.f32 %v1069, %v1070
        %v1072 = vand.u32 %v1071, 4294901760
        %1073 = vmatprep.subr.mxu0 %v1072
        %v1074 = vand.u32 %v949, 4294901760
        %v1075 = vsub.f32 %v949, %v1074
        %v1076 = vand.u32 %v1075, 4294901760
        %v1077 = vsub.f32 %v1075, %v1076
        %v1078 = vand.u32 %v1077, 4294901760
        %1079 = vmatpush1.msra.mxu0 %v1078
        %v1080 = vand.u32 %v952, 4294901760
        %v1081 = vsub.f32 %v952, %v1080
        %v1082 = vand.u32 %v1081, 4294901760
        %v1083 = vsub.f32 %v1081, %v1082
        %v1084 = vand.u32 %v1083, 4294901760
        %1085 = vmatprep.subr.mxu0 %v1084
        %v1086 = vand.u32 %v951, 4294901760
        %v1087 = vsub.f32 %v951, %v1086
        %v1088 = vand.u32 %v1087, 4294901760
        %v1089 = vsub.f32 %v1087, %v1088
        %v1090 = vand.u32 %v1089, 4294901760
        %1091 = vmatpush1.msra.mxu0 %v1090
        %v1092 = vand.u32 %v954, 4294901760
        %v1093 = vsub.f32 %v954, %v1092
        %v1094 = vand.u32 %v1093, 4294901760
        %v1095 = vsub.f32 %v1093, %v1094
        %v1096 = vand.u32 %v1095, 4294901760
        %1097 = vmatprep.subr.mxu0 %v1096
        %v1098 = vand.u32 %v953, 4294901760
        %v1099 = vsub.f32 %v953, %v1098
        %v1100 = vand.u32 %v1099, 4294901760
        %v1101 = vsub.f32 %v1099, %v1100
        %v1102 = vand.u32 %v1101, 4294901760
        %1103 = vmatpush1.msra.mxu0 %v1102
        %1104 = vmatprep.subr.mxu0 0.0
        %1105 = vmatpush1.msra.mxu0 0.0
        %1106 = vmatprep.subr.mxu0 0.0
        %1107 = vmatpush1.msra.mxu0 0.0
        %1108 = vmatprep.subr.mxu0 0.0
        %1109 = vmatpush1.msra.mxu0 0.0
        %1110 = vmatprep.subr.mxu0 0.0
        %1111 = vmatpush1.msra.mxu0 0.0
        %1112 = vmatprep.subr.mxu0 0.0
        %1113 = vmatpush1.msra.mxu0 0.0
        %1114 = vmatprep.subr.mxu0 0.0
        %1115 = vmatpush1.msra.mxu0 0.0
        %1116 = vmatprep.subr.mxu0 0.0
        %1117 = vmatpush1.msra.mxu0 0.0
        %1118 = vmatprep.subr.mxu0 0.0
        %1119 = vmatpush1.msra.mxu0 0.0
        %1120 = vmatprep.subr.mxu0 0.0
        %1121 = vmatpush1.msra.mxu0 0.0
        %1122 = vmatprep.subr.mxu0 0.0
        %1123 = vmatpush1.msra.mxu0 0.0
        %1124 = vmatprep.subr.mxu0 0.0
        %1125 = vmatpush1.msra.mxu0 0.0
        %1126 = vmatprep.subr.mxu0 0.0
        %1127 = vmatpush1.msra.mxu0 0.0
        %1128 = vmatprep.subr.mxu0 0.0
        %1129 = vmatpush1.msra.mxu0 0.0
        %1130 = vmatprep.subr.mxu0 0.0
        %1131 = vmatpush1.msra.mxu0 0.0
        %1132 = vmatprep.subr.mxu0 0.0
        %1133 = vmatpush1.msra.mxu0 0.0
        %1134 = vmatprep.subr.mxu0 0.0
        %1135 = vmatpush1.msra.mxu0 0.0
        %1136 = vmatprep.subr.mxu0 0.0
        %1137 = vmatpush1.msra.mxu0 0.0
        %1138 = vmatprep.subr.mxu0 0.0
        %1139 = vmatpush1.msra.mxu0 0.0
        %1140 = vmatprep.subr.mxu0 0.0
        %1141 = vmatpush1.msra.mxu0 0.0
        %1142 = vmatprep.subr.mxu0 0.0
        %1143 = vmatpush1.msra.mxu0 0.0
        %1144 = vmatprep.subr.mxu0 0.0
        %1145 = vmatpush1.msra.mxu0 0.0
        %1146 = vmatprep.subr.mxu0 0.0
        %1147 = vmatpush1.msra.mxu0 0.0
        %1148 = vmatprep.subr.mxu0 0.0
        %1149 = vmatpush1.msra.mxu0 0.0
        %1150 = vmatprep.subr.mxu0 0.0
        %1151 = vmatpush1.msra.mxu0 0.0
        %1152 = vmatprep.subr.mxu0 0.0
        %1153 = vmatpush1.msra.mxu0 0.0
        %1154 = vmatprep.subr.mxu0 0.0
        %1155 = vmatpush1.msra.mxu0 0.0
        %1156 = vmatprep.subr.mxu0 0.0
        %1157 = vmatpush1.msra.mxu0 0.0
        %1158 = vmatprep.subr.mxu0 0.0
        %1159 = vmatpush1.msra.mxu0 0.0
        %1160 = vmatprep.mubr.f32.mxu0 0.0
        %v1161 = vand.u32 %v970, 4294901760
        %1162 = vmatmul.mubr.f32.gmra.mrb[0].mxu0 %v1161
        %v1163 = vpop.f32.mrb[0].mxu0
        %v1164 = vadd.f32 %v1052, %v1163
        %v1165 = vpop.f32.mrb[0].mxu0
        %v1166 = vadd.f32 %v1054, %v1165
        %1167 = vdwg.mxu0
        %v1168 = vand.u32 %v948, 4294901760
        %v1169 = vsub.f32 %v948, %v1168
        %1170 = vmatprep.subr.mxu0 %v1169
        %v1171 = vand.u32 %v947, 4294901760
        %v1172 = vsub.f32 %v947, %v1171
        %1173 = vmatpush1.msra.mxu0 %v1172
        %v1174 = vand.u32 %v950, 4294901760
        %v1175 = vsub.f32 %v950, %v1174
        %1176 = vmatprep.subr.mxu0 %v1175
        %v1177 = vand.u32 %v949, 4294901760
        %v1178 = vsub.f32 %v949, %v1177
        %1179 = vmatpush1.msra.mxu0 %v1178
        %v1180 = vand.u32 %v952, 4294901760
        %v1181 = vsub.f32 %v952, %v1180
        %1182 = vmatprep.subr.mxu0 %v1181
        %v1183 = vand.u32 %v951, 4294901760
        %v1184 = vsub.f32 %v951, %v1183
        %1185 = vmatpush1.msra.mxu0 %v1184
        %v1186 = vand.u32 %v954, 4294901760
        %v1187 = vsub.f32 %v954, %v1186
        %1188 = vmatprep.subr.mxu0 %v1187
        %v1189 = vand.u32 %v953, 4294901760
        %v1190 = vsub.f32 %v953, %v1189
        %1191 = vmatpush1.msra.mxu0 %v1190
        %1192 = vmatprep.subr.mxu0 0.0
        %1193 = vmatpush1.msra.mxu0 0.0
        %1194 = vmatprep.subr.mxu0 0.0
        %1195 = vmatpush1.msra.mxu0 0.0
        %1196 = vmatprep.subr.mxu0 0.0
        %1197 = vmatpush1.msra.mxu0 0.0
        %1198 = vmatprep.subr.mxu0 0.0
        %1199 = vmatpush1.msra.mxu0 0.0
        %1200 = vmatprep.subr.mxu0 0.0
        %1201 = vmatpush1.msra.mxu0 0.0
        %1202 = vmatprep.subr.mxu0 0.0
        %1203 = vmatpush1.msra.mxu0 0.0
        %1204 = vmatprep.subr.mxu0 0.0
        %1205 = vmatpush1.msra.mxu0 0.0
        %1206 = vmatprep.subr.mxu0 0.0
        %1207 = vmatpush1.msra.mxu0 0.0
        %1208 = vmatprep.subr.mxu0 0.0
        %1209 = vmatpush1.msra.mxu0 0.0
        %1210 = vmatprep.subr.mxu0 0.0
        %1211 = vmatpush1.msra.mxu0 0.0
        %1212 = vmatprep.subr.mxu0 0.0
        %1213 = vmatpush1.msra.mxu0 0.0
        %1214 = vmatprep.subr.mxu0 0.0
        %1215 = vmatpush1.msra.mxu0 0.0
        %1216 = vmatprep.subr.mxu0 0.0
        %1217 = vmatpush1.msra.mxu0 0.0
        %1218 = vmatprep.subr.mxu0 0.0
        %1219 = vmatpush1.msra.mxu0 0.0
        %1220 = vmatprep.subr.mxu0 0.0
        %1221 = vmatpush1.msra.mxu0 0.0
        %1222 = vmatprep.subr.mxu0 0.0
        %1223 = vmatpush1.msra.mxu0 0.0
        %1224 = vmatprep.subr.mxu0 0.0
        %1225 = vmatpush1.msra.mxu0 0.0
        %1226 = vmatprep.subr.mxu0 0.0
        %1227 = vmatpush1.msra.mxu0 0.0
        %1228 = vmatprep.subr.mxu0 0.0
        %1229 = vmatpush1.msra.mxu0 0.0
        %1230 = vmatprep.subr.mxu0 0.0
        %1231 = vmatpush1.msra.mxu0 0.0
        %1232 = vmatprep.subr.mxu0 0.0
        %1233 = vmatpush1.msra.mxu0 0.0
        %1234 = vmatprep.subr.mxu0 0.0
        %1235 = vmatpush1.msra.mxu0 0.0
        %1236 = vmatprep.subr.mxu0 0.0
        %1237 = vmatpush1.msra.mxu0 0.0
        %1238 = vmatprep.subr.mxu0 0.0
        %1239 = vmatpush1.msra.mxu0 0.0
        %1240 = vmatprep.subr.mxu0 0.0
        %1241 = vmatpush1.msra.mxu0 0.0
        %1242 = vmatprep.subr.mxu0 0.0
        %1243 = vmatpush1.msra.mxu0 0.0
        %1244 = vmatprep.subr.mxu0 0.0
        %1245 = vmatpush1.msra.mxu0 0.0
        %1246 = vmatprep.subr.mxu0 0.0
        %1247 = vmatpush1.msra.mxu0 0.0
        %1248 = vmatprep.mubr.f32.mxu0 0.0
        %v1249 = vand.u32 %v970, 4294901760
        %v1250 = vsub.f32 %v970, %v1249
        %1251 = vmatmul.mubr.f32.gmra.mrb[0].mxu0 %v1250
        %v1252 = vpop.f32.mrb[0].mxu0
        %v1253 = vadd.f32 %v1164, %v1252
        %v1254 = vpop.f32.mrb[0].mxu0
        %v1255 = vadd.f32 %v1166, %v1254
        %1256 = vdwg.mxu0
        %v1257 = vand.u32 %v948, 4294901760
        %1258 = vmatprep.subr.mxu0 %v1257
        %v1259 = vand.u32 %v947, 4294901760
        %1260 = vmatpush1.msra.mxu0 %v1259
        %v1261 = vand.u32 %v950, 4294901760
        %1262 = vmatprep.subr.mxu0 %v1261
        %v1263 = vand.u32 %v949, 4294901760
        %1264 = vmatpush1.msra.mxu0 %v1263
        %v1265 = vand.u32 %v952, 4294901760
        %1266 = vmatprep.subr.mxu0 %v1265
        %v1267 = vand.u32 %v951, 4294901760
        %1268 = vmatpush1.msra.mxu0 %v1267
        %v1269 = vand.u32 %v954, 4294901760
        %1270 = vmatprep.subr.mxu0 %v1269
        %v1271 = vand.u32 %v953, 4294901760
        %1272 = vmatpush1.msra.mxu0 %v1271
        %1273 = vmatprep.subr.mxu0 0.0
        %1274 = vmatpush1.msra.mxu0 0.0
        %1275 = vmatprep.subr.mxu0 0.0
        %1276 = vmatpush1.msra.mxu0 0.0
        %1277 = vmatprep.subr.mxu0 0.0
        %1278 = vmatpush1.msra.mxu0 0.0
        %1279 = vmatprep.subr.mxu0 0.0
        %1280 = vmatpush1.msra.mxu0 0.0
        %1281 = vmatprep.subr.mxu0 0.0
        %1282 = vmatpush1.msra.mxu0 0.0
        %1283 = vmatprep.subr.mxu0 0.0
        %1284 = vmatpush1.msra.mxu0 0.0
        %1285 = vmatprep.subr.mxu0 0.0
        %1286 = vmatpush1.msra.mxu0 0.0
        %1287 = vmatprep.subr.mxu0 0.0
        %1288 = vmatpush1.msra.mxu0 0.0
        %1289 = vmatprep.subr.mxu0 0.0
        %1290 = vmatpush1.msra.mxu0 0.0
        %1291 = vmatprep.subr.mxu0 0.0
        %1292 = vmatpush1.msra.mxu0 0.0
        %1293 = vmatprep.subr.mxu0 0.0
        %1294 = vmatpush1.msra.mxu0 0.0
        %1295 = vmatprep.subr.mxu0 0.0
        %1296 = vmatpush1.msra.mxu0 0.0
        %1297 = vmatprep.subr.mxu0 0.0
        %1298 = vmatpush1.msra.mxu0 0.0
        %1299 = vmatprep.subr.mxu0 0.0
        %1300 = vmatpush1.msra.mxu0 0.0
        %1301 = vmatprep.subr.mxu0 0.0
        %1302 = vmatpush1.msra.mxu0 0.0
        %1303 = vmatprep.subr.mxu0 0.0
        %1304 = vmatpush1.msra.mxu0 0.0
        %1305 = vmatprep.subr.mxu0 0.0
        %1306 = vmatpush1.msra.mxu0 0.0
        %1307 = vmatprep.subr.mxu0 0.0
        %1308 = vmatpush1.msra.mxu0 0.0
        %1309 = vmatprep.subr.mxu0 0.0
        %1310 = vmatpush1.msra.mxu0 0.0
        %1311 = vmatprep.subr.mxu0 0.0
        %1312 = vmatpush1.msra.mxu0 0.0
        %1313 = vmatprep.subr.mxu0 0.0
        %1314 = vmatpush1.msra.mxu0 0.0
        %1315 = vmatprep.subr.mxu0 0.0
        %1316 = vmatpush1.msra.mxu0 0.0
        %1317 = vmatprep.subr.mxu0 0.0
        %1318 = vmatpush1.msra.mxu0 0.0
        %1319 = vmatprep.subr.mxu0 0.0
        %1320 = vmatpush1.msra.mxu0 0.0
        %1321 = vmatprep.subr.mxu0 0.0
        %1322 = vmatpush1.msra.mxu0 0.0
        %1323 = vmatprep.subr.mxu0 0.0
        %1324 = vmatpush1.msra.mxu0 0.0
        %1325 = vmatprep.subr.mxu0 0.0
        %1326 = vmatpush1.msra.mxu0 0.0
        %1327 = vmatprep.subr.mxu0 0.0
        %1328 = vmatpush1.msra.mxu0 0.0
        %1329 = vmatprep.mubr.f32.mxu0 0.0
        %v1330 = vand.u32 %v970, 4294901760
        %v1331 = vsub.f32 %v970, %v1330
        %v1332 = vand.u32 %v1331, 4294901760
        %1333 = vmatmul.mubr.f32.gmra.mrb[0].mxu0 %v1332
        %v1334 = vpop.f32.mrb[0].mxu0
        %v1335 = vadd.f32 %v1253, %v1334
        %v1336 = vpop.f32.mrb[0].mxu0
        %v1337 = vadd.f32 %v1255, %v1336
        %1338 = vdwg.mxu0
        %v1339 = vand.u32 %v948, 4294901760
        %v1340 = vsub.f32 %v948, %v1339
        %v1341 = vand.u32 %v1340, 4294901760
        %1342 = vmatprep.subr.mxu0 %v1341
        %v1343 = vand.u32 %v947, 4294901760
        %v1344 = vsub.f32 %v947, %v1343
        %v1345 = vand.u32 %v1344, 4294901760
        %1346 = vmatpush1.msra.mxu0 %v1345
        %v1347 = vand.u32 %v950, 4294901760
        %v1348 = vsub.f32 %v950, %v1347
        %v1349 = vand.u32 %v1348, 4294901760
        %1350 = vmatprep.subr.mxu0 %v1349
        %v1351 = vand.u32 %v949, 4294901760
        %v1352 = vsub.f32 %v949, %v1351
        %v1353 = vand.u32 %v1352, 4294901760
        %1354 = vmatpush1.msra.mxu0 %v1353
        %v1355 = vand.u32 %v952, 4294901760
        %v1356 = vsub.f32 %v952, %v1355
        %v1357 = vand.u32 %v1356, 4294901760
        %1358 = vmatprep.subr.mxu0 %v1357
        %v1359 = vand.u32 %v951, 4294901760
        %v1360 = vsub.f32 %v951, %v1359
        %v1361 = vand.u32 %v1360, 4294901760
        %1362 = vmatpush1.msra.mxu0 %v1361
        %v1363 = vand.u32 %v954, 4294901760
        %v1364 = vsub.f32 %v954, %v1363
        %v1365 = vand.u32 %v1364, 4294901760
        %1366 = vmatprep.subr.mxu0 %v1365
        %v1367 = vand.u32 %v953, 4294901760
        %v1368 = vsub.f32 %v953, %v1367
        %v1369 = vand.u32 %v1368, 4294901760
        %1370 = vmatpush1.msra.mxu0 %v1369
        %1371 = vmatprep.subr.mxu0 0.0
        %1372 = vmatpush1.msra.mxu0 0.0
        %1373 = vmatprep.subr.mxu0 0.0
        %1374 = vmatpush1.msra.mxu0 0.0
        %1375 = vmatprep.subr.mxu0 0.0
        %1376 = vmatpush1.msra.mxu0 0.0
        %1377 = vmatprep.subr.mxu0 0.0
        %1378 = vmatpush1.msra.mxu0 0.0
        %1379 = vmatprep.subr.mxu0 0.0
        %1380 = vmatpush1.msra.mxu0 0.0
        %1381 = vmatprep.subr.mxu0 0.0
        %1382 = vmatpush1.msra.mxu0 0.0
        %1383 = vmatprep.subr.mxu0 0.0
        %1384 = vmatpush1.msra.mxu0 0.0
        %1385 = vmatprep.subr.mxu0 0.0
        %1386 = vmatpush1.msra.mxu0 0.0
        %1387 = vmatprep.subr.mxu0 0.0
        %1388 = vmatpush1.msra.mxu0 0.0
        %1389 = vmatprep.subr.mxu0 0.0
        %1390 = vmatpush1.msra.mxu0 0.0
        %1391 = vmatprep.subr.mxu0 0.0
        %1392 = vmatpush1.msra.mxu0 0.0
        %1393 = vmatprep.subr.mxu0 0.0
        %1394 = vmatpush1.msra.mxu0 0.0
        %1395 = vmatprep.subr.mxu0 0.0
        %1396 = vmatpush1.msra.mxu0 0.0
        %1397 = vmatprep.subr.mxu0 0.0
        %1398 = vmatpush1.msra.mxu0 0.0
        %1399 = vmatprep.subr.mxu0 0.0
        %1400 = vmatpush1.msra.mxu0 0.0
        %1401 = vmatprep.subr.mxu0 0.0
        %1402 = vmatpush1.msra.mxu0 0.0
        %1403 = vmatprep.subr.mxu0 0.0
        %1404 = vmatpush1.msra.mxu0 0.0
        %1405 = vmatprep.subr.mxu0 0.0
        %1406 = vmatpush1.msra.mxu0 0.0
        %1407 = vmatprep.subr.mxu0 0.0
        %1408 = vmatpush1.msra.mxu0 0.0
        %1409 = vmatprep.subr.mxu0 0.0
        %1410 = vmatpush1.msra.mxu0 0.0
        %1411 = vmatprep.subr.mxu0 0.0
        %1412 = vmatpush1.msra.mxu0 0.0
        %1413 = vmatprep.subr.mxu0 0.0
        %1414 = vmatpush1.msra.mxu0 0.0
        %1415 = vmatprep.subr.mxu0 0.0
        %1416 = vmatpush1.msra.mxu0 0.0
        %1417 = vmatprep.subr.mxu0 0.0
        %1418 = vmatpush1.msra.mxu0 0.0
        %1419 = vmatprep.subr.mxu0 0.0
        %1420 = vmatpush1.msra.mxu0 0.0
        %1421 = vmatprep.subr.mxu0 0.0
        %1422 = vmatpush1.msra.mxu0 0.0
        %1423 = vmatprep.subr.mxu0 0.0
        %1424 = vmatpush1.msra.mxu0 0.0
        %1425 = vmatprep.subr.mxu0 0.0
        %1426 = vmatpush1.msra.mxu0 0.0
        %1427 = vmatprep.mubr.f32.mxu0 0.0
        %v1428 = vand.u32 %v970, 4294901760
        %1429 = vmatmul.mubr.f32.gmra.mrb[0].mxu0 %v1428
        %v1430 = vpop.f32.mrb[0].mxu0
        %v1431 = vadd.f32 %v1335, %v1430
        %v1432 = vpop.f32.mrb[0].mxu0
        %v1433 = vadd.f32 %v1337, %v1432
        %1434 = vdwg.mxu0
        %v1435 = vand.u32 %v948, 4294901760
        %1436 = vmatprep.subr.mxu0 %v1435
        %v1437 = vand.u32 %v947, 4294901760
        %1438 = vmatpush1.msra.mxu0 %v1437
        %v1439 = vand.u32 %v950, 4294901760
        %1440 = vmatprep.subr.mxu0 %v1439
        %v1441 = vand.u32 %v949, 4294901760
        %1442 = vmatpush1.msra.mxu0 %v1441
        %v1443 = vand.u32 %v952, 4294901760
        %1444 = vmatprep.subr.mxu0 %v1443
        %v1445 = vand.u32 %v951, 4294901760
        %1446 = vmatpush1.msra.mxu0 %v1445
        %v1447 = vand.u32 %v954, 4294901760
        %1448 = vmatprep.subr.mxu0 %v1447
        %v1449 = vand.u32 %v953, 4294901760
        %1450 = vmatpush1.msra.mxu0 %v1449
        %1451 = vmatprep.subr.mxu0 0.0
        %1452 = vmatpush1.msra.mxu0 0.0
        %1453 = vmatprep.subr.mxu0 0.0
        %1454 = vmatpush1.msra.mxu0 0.0
        %1455 = vmatprep.subr.mxu0 0.0
        %1456 = vmatpush1.msra.mxu0 0.0
        %1457 = vmatprep.subr.mxu0 0.0
        %1458 = vmatpush1.msra.mxu0 0.0
        %1459 = vmatprep.subr.mxu0 0.0
        %1460 = vmatpush1.msra.mxu0 0.0
        %1461 = vmatprep.subr.mxu0 0.0
        %1462 = vmatpush1.msra.mxu0 0.0
        %1463 = vmatprep.subr.mxu0 0.0
        %1464 = vmatpush1.msra.mxu0 0.0
        %1465 = vmatprep.subr.mxu0 0.0
        %1466 = vmatpush1.msra.mxu0 0.0
        %1467 = vmatprep.subr.mxu0 0.0
        %1468 = vmatpush1.msra.mxu0 0.0
        %1469 = vmatprep.subr.mxu0 0.0
        %1470 = vmatpush1.msra.mxu0 0.0
        %1471 = vmatprep.subr.mxu0 0.0
        %1472 = vmatpush1.msra.mxu0 0.0
        %1473 = vmatprep.subr.mxu0 0.0
        %1474 = vmatpush1.msra.mxu0 0.0
        %1475 = vmatprep.subr.mxu0 0.0
        %1476 = vmatpush1.msra.mxu0 0.0
        %1477 = vmatprep.subr.mxu0 0.0
        %1478 = vmatpush1.msra.mxu0 0.0
        %1479 = vmatprep.subr.mxu0 0.0
        %1480 = vmatpush1.msra.mxu0 0.0
        %1481 = vmatprep.subr.mxu0 0.0
        %1482 = vmatpush1.msra.mxu0 0.0
        %1483 = vmatprep.subr.mxu0 0.0
        %1484 = vmatpush1.msra.mxu0 0.0
        %1485 = vmatprep.subr.mxu0 0.0
        %1486 = vmatpush1.msra.mxu0 0.0
        %1487 = vmatprep.subr.mxu0 0.0
        %1488 = vmatpush1.msra.mxu0 0.0
        %1489 = vmatprep.subr.mxu0 0.0
        %1490 = vmatpush1.msra.mxu0 0.0
        %1491 = vmatprep.subr.mxu0 0.0
        %1492 = vmatpush1.msra.mxu0 0.0
        %1493 = vmatprep.subr.mxu0 0.0
        %1494 = vmatpush1.msra.mxu0 0.0
        %1495 = vmatprep.subr.mxu0 0.0
        %1496 = vmatpush1.msra.mxu0 0.0
        %1497 = vmatprep.subr.mxu0 0.0
        %1498 = vmatpush1.msra.mxu0 0.0
        %1499 = vmatprep.subr.mxu0 0.0
        %1500 = vmatpush1.msra.mxu0 0.0
        %1501 = vmatprep.subr.mxu0 0.0
        %1502 = vmatpush1.msra.mxu0 0.0
        %1503 = vmatprep.subr.mxu0 0.0
        %1504 = vmatpush1.msra.mxu0 0.0
        %1505 = vmatprep.subr.mxu0 0.0
        %1506 = vmatpush1.msra.mxu0 0.0
        %1507 = vmatprep.mubr.f32.mxu0 0.0
        %v1508 = vand.u32 %v970, 4294901760
        %1509 = vmatmul.mubr.f32.gmra.mrb[0].mxu0 %v1508
        %v1510 = vpop.f32.mrb[0].mxu0
        %v1511 = vadd.f32 %v1431, %v1510
        %v1512 = vpop.f32.mrb[0].mxu0
        %v1513 = vadd.f32 %v1433, %v1512
        %1514 = vdwg.mxu0
        %v1515 = vsel %vm763, %v1511, -inf
        %v1516 = vsel %vm763, %v1513, -inf
        %v1517 = vmax.f32 %v1515, %v1516
        %1518 = vmax.xlane.f32.xlu0 %v1517
        %v1519 = vpop.xlane.xlu0 %1518
        %v1520 = vsub.f32 %v1511, %v1519
        %v1521 = vsub.f32 %v1513, %v1519
        %v1522 = vmul.f32 %v1520, 1.442695
        %v1523 = vpow.pop %v1522
        %v1524 = vmul.f32 %v1521, 1.442695
        %v1525 = vpow.pop %v1524
        %v1526 = vsel %vm763, %v1523, 0.0
        %v1527 = vsel %vm763, %v1525, 0.0
        %v1528 = vadd.f32 %v1526, %v1527
        %1529 = vadd.xlane.f32.xlu0 %v1528
        %v1530 = vpop.xlane.xlu0 %1529
        %v1531 = vlaneseq
        %v1532 = vshrl.u32 %v1531, 7
        %v1533 = vsub.s32 0, %v1532
        %v1534 = vrot.slane %v1523, %v1533
        %v1535 = vlaneseq
        %v1536 = vshrl.u32 %v1535, 7
        %v1537 = vsub.s32 0, %v1536
        %v1538 = vrot.slane %v1525, %v1537
        %v1539 = vmul.f32 %v947, %v1534
        %v1540 = vmul.f32 %v948, %v1538
        %v1541 = vmul.f32 %v949, %v1534
        %v1542 = vmul.f32 %v950, %v1538
        %v1543 = vmul.f32 %v951, %v1534
        %v1544 = vmul.f32 %v952, %v1538
        %v1545 = vmul.f32 %v953, %v1534
        %v1546 = vmul.f32 %v954, %v1538
        %v1547 = vadd.f32 %v1539, %v1540
        %1548 = vadd.xlane.f32.xlu0 %v1547
        %v1549 = vpop.xlane.xlu0 %1548
        %v1550 = vadd.f32 %v1541, %v1542
        %1551 = vadd.xlane.f32.xlu0 %v1550
        %v1552 = vpop.xlane.xlu0 %1551
        %v1553 = vadd.f32 %v1543, %v1544
        %1554 = vadd.xlane.f32.xlu0 %v1553
        %v1555 = vpop.xlane.xlu0 %1554
        %v1556 = vadd.f32 %v1545, %v1546
        %1557 = vadd.xlane.f32.xlu0 %v1556
        %v1558 = vpop.xlane.xlu0 %1557
        %v1559 = vrcp.pop %v1530
        %v1560 = vlaneseq
        %v1561 = vshrl.u32 %v1560, 7
        %v1562 = vsub.s32 0, %v1561
        %v1563 = vrot.slane %v1559, %v1562
        %v1564 = vmul.f32 %v1549, %v1563
        %v1565 = vmul.f32 %v1552, %v1563
        %v1566 = vmul.f32 %v1555, %v1563
        %v1567 = vmul.f32 %v1558, %v1563
        %v1568 = vmul.f32 %v941, %v1564
        %v1569 = vmul.f32 %v942, %v1565
        %v1570 = vmul.f32 %v943, %v1566
        %v1571 = vmul.f32 %v944, %v1567
        %v1572 = vsel %vm821, %v1568, 0.0
        %v1573 = vsel %vm821, %v1569, 0.0
        %v1574 = vadd.f32 %v1572, %v1573
        %v1575 = vsel %vm821, %v1570, 0.0
        %v1576 = vadd.f32 %v1574, %v1575
        %v1577 = vsel %vm821, %v1571, 0.0
        %v1578 = vadd.f32 %v1576, %v1577
        %v1579 = vrot.slane %v1578, 4
        %v1580 = vadd.f32 %v1578, %v1579
        %v1581 = vrot.slane %v1580, 2
        %v1582 = vadd.f32 %v1580, %v1581
        %v1583 = vrot.slane %v1582, 1
        %v1584 = vadd.f32 %v1582, %v1583
        %v1585 = vadd.f32 %v1584, %v946
        %v1586 = vsel %vm836, %v1585, 0.0
        %1587 = vadd.xlane.f32.xlu0 %v1586
        %v1588 = vpop.xlane.xlu0 %1587
        %v1589 = vmul.f32 %v1588, %v840
        %v1590 = vsub.f32 %v1585, %v1589
        %v1591 = vmul.f32 %v1590, %v1590
        %v1592 = vsel %vm836, %v1591, 0.0
        %1593 = vadd.xlane.f32.xlu0 %v1592
        %v1594 = vpop.xlane.xlu0 %1593
        %v1595 = vmul.f32 %v1594, %v840
        %v1596 = vadd.f32 %v1595, 1e-05
        %v1597 = vrsqrt.pop %v1596
        %v1598 = vmul.f32 %v1590, %v1597
        %1599 = vrot.lane.b32.xlu0 %v967, 120
        %v1600 = vpop.permute.xlu0 %1599
        %v1602 = vmul.f32 %v1598, %v1600
        %1603 = vrot.lane.b32.xlu0 %v967, 112
        %v1604 = vpop.permute.xlu0 %1603
        %v1606 = vadd.f32 %v1602, %v1604
        %v1607 = vmax.f32 %v1606, 0.0
        %v1608 = vlaneseq
        %v1609 = vshrl.u32 %v1608, 7
        %v1610 = vsub.s32 0, %v1609
        %v1611 = vrot.slane %v1607, %v1610
        %1613 = vrot.lane.b32.xlu0 %v1611, 8
        %v1614 = vpop.permute.xlu0 %1613
        %v1616 = vmul.f32 %v941, %v1614
        %v1617 = vmul.f32 %v942, %v1614
        %v1618 = vmul.f32 %v943, %v1614
        %v1619 = vmul.f32 %v944, %v1614
        %1624 = vrot.lane.b32.xlu0 %v1616, 120
        %v1625 = vpop.permute.xlu0 %1624
        %1626 = vrot.lane.b32.xlu0 %v1617, 120
        %v1627 = vpop.permute.xlu0 %1626
        %1628 = vrot.lane.b32.xlu0 %v1618, 120
        %v1629 = vpop.permute.xlu0 %1628
        %1630 = vrot.lane.b32.xlu0 %v1619, 120
        %v1631 = vpop.permute.xlu0 %1630
        %v1636 = vsel %vm821, %v1625, 0.0
        %1637 = vadd.xlane.f32.xlu0 %v1636
        %v1638 = vpop.xlane.xlu0 %1637
        %v1639 = vsel %vm821, %v1627, 0.0
        %1640 = vadd.xlane.f32.xlu0 %v1639
        %v1641 = vpop.xlane.xlu0 %1640
        %v1642 = vsel %vm821, %v1629, 0.0
        %1643 = vadd.xlane.f32.xlu0 %v1642
        %v1644 = vpop.xlane.xlu0 %1643
        %v1645 = vsel %vm821, %v1631, 0.0
        %1646 = vadd.xlane.f32.xlu0 %v1645
        %v1647 = vpop.xlane.xlu0 %1646
        %v1648 = vadd.f32 %v1638, %v941
        %v1649 = vadd.f32 %v1641, %v942
        %v1650 = vadd.f32 %v1644, %v943
        %v1651 = vadd.f32 %v1647, %v944
        %1653 = vset.pattern.permute.xlu0 16
        %1654 = vperm.xlu0 %1653, %v1648
        %v1655 = vpop.permute.xlu0 %1654
        %1658 = vset.pattern.permute.xlu0 16
        %1659 = vperm.xlu0 %1658, %v1649
        %v1660 = vpop.permute.xlu0 %1659
        %1663 = vset.pattern.permute.xlu0 16
        %1664 = vperm.xlu0 %1663, %v1650
        %v1665 = vpop.permute.xlu0 %1664
        %1668 = vset.pattern.permute.xlu0 16
        %1669 = vperm.xlu0 %1668, %v1651
        %v1670 = vpop.permute.xlu0 %1669
        %v1672 = vadd.f32 %v947, %v1655
        %v1673 = vadd.f32 %v948, %v1655
        %v1674 = vadd.f32 %v949, %v1660
        %v1675 = vadd.f32 %v950, %v1660
        %v1676 = vadd.f32 %v951, %v1665
        %v1677 = vadd.f32 %v952, %v1665
        %v1678 = vadd.f32 %v953, %v1670
        %v1679 = vadd.f32 %v954, %v1670
        %1680 = vst [vmem:[#allocation2] sm:$0xff] %v1672
        %1681 = vst [vmem:[#allocation2 + $0x8] sm:$0xff] %v1673
        %1682 = vst [vmem:[#allocation2 + $0x10] sm:$0xff] %v1674
        %1683 = vst [vmem:[#allocation2 + $0x18] sm:$0xff] %v1675
        %1684 = vst [vmem:[#allocation2 + $0x20] sm:$0xff] %v1676
        %1685 = vst [vmem:[#allocation2 + $0x28] sm:$0xff] %v1677
        %1686 = vst [vmem:[#allocation2 + $0x30] sm:$0xff] %v1678
        %1687 = vst [vmem:[#allocation2 + $0x38] sm:$0xff] %v1679
        %v1688 = vld [vmem:[#allocation2] sm:$0xff]
        %v1689 = vld [vmem:[#allocation2 + $0x8] sm:$0xff]
        %v1690 = vld [vmem:[#allocation2 + $0x10] sm:$0xff]
        %v1691 = vld [vmem:[#allocation2 + $0x18] sm:$0xff]
        %v1692 = vld [vmem:[#allocation2 + $0x20] sm:$0xff]
        %v1693 = vld [vmem:[#allocation2 + $0x28] sm:$0xff]
        %v1694 = vld [vmem:[#allocation2 + $0x30] sm:$0xff]
        %v1695 = vld [vmem:[#allocation2 + $0x38] sm:$0xff]
        %v1696 = vpack.c.bf16 %v1690, %v1688
        %v1697 = vpack.c.bf16 %v1691, %v1689
        %v1698 = vpack.c.bf16 %v1694, %v1692
        %v1699 = vpack.c.bf16 %v1695, %v1693
        %v1704 = vunpack.c.l.b16 %v1696
        %v1705 = vunpack.c.l.b16 %v1697
        %v1706 = vunpack.c.h.b16 %v1696
        %v1707 = vunpack.c.h.b16 %v1697
        %v1708 = vunpack.c.l.b16 %v1698
        %v1709 = vunpack.c.l.b16 %v1699
        %v1710 = vunpack.c.h.b16 %v1698
        %v1711 = vunpack.c.h.b16 %v1699
        %v1712 = vpack.c.b16 %v1705, %v1704
        %v1713 = vpack.c.b16 %v1707, %v1706
        %v1714 = vpack.c.b16 %v1709, %v1708
        %v1715 = vpack.c.b16 %v1711, %v1710
        %1720 = vst [vmem:[%s163] sm:$0xff] %v1712
        %1721 = vst [vmem:[%s163 + $0x8] sm:$0xff] %v1713
        %1722 = vst [vmem:[%s163 + $0x10] sm:$0xff] %v1714
        %1723 = vst [vmem:[%s163 + $0x18] sm:$0xff] %v1715
        %s1724 = sand.u32 %s93, 1
        %s1725 = scalar_lea.sflag [#allocation4], %s1724
        %s1726 = sand.u32 %s93, 1
        %s1727 = smul.addr %s1726, 32
        %s1728 = scalar_lea.vmem [#allocation3], %s1727
        // Predicated region
        $region33: #{tpu_custom_call.1} parent=31 // pred_check
          %p1729 = pneg %p103
        $region34: #{tpu_custom_call.1} parent=31 // pred_check_branch
          %1731 = sbr.rel (%p1729) target = $region36
        $region35: #{tpu_custom_call.1} parent=31 // pred_region
          %s1733 = ssub.s32 512, 512
          %1734 = vsyncadd %s1725, %s1733
          %s1735 = smul.addr %s17, 8
          %s1736 = smul.addr %s1735, 64
          %s1737 = scalar_lea.hbm %s3, %s1736
          %s1738 = sshll.u32 %s1728, 4
          %s1739 = int_to_ptr.vmem [resolvable:$true] %s1738
          %1744 = dma.vmem_to_hbm [thread:$0]  %s1739, 512, %s1737, %s1725, 128, 128, 8
        $region36: #{tpu_custom_call.1} parent=31 // pred_fallthru
          _
      $region32: #{tpu_custom_call.1} parent=5 // pred_fallthru
        _
      %p1745 = scmp.le.s32.totalorder 2, %s12
      // Predicated region
      $region37: #{tpu_custom_call.1} parent=5 // pred_check
        %p1746 = pneg %p1745
      $region38: #{tpu_custom_call.1} parent=5 // pred_check_branch
        %1748 = sbr.rel (%p1746) target = $region40
      $region39: #{tpu_custom_call.1} parent=5 // pred_region
        %s1749 = ssub.s32 %s12, 2
        // Predicated region
        $region41: #{tpu_custom_call.1} parent=39 // pred_check
          %p1750 = pneg %p109
        $region42: #{tpu_custom_call.1} parent=39 // pred_check_branch
          %1752 = sbr.rel (%p1750) target = $region44
        $region43: #{tpu_custom_call.1} parent=39 // pred_region
          %s1753 = sand.u32 %s94, 1
          %s1754 = scalar_lea.sflag [#allocation4], %s1753
          %s1755 = sand.u32 %s94, 1
          %s1756 = smul.addr %s1755, 32
          %s1757 = scalar_lea.vmem [#allocation3], %s1756
          %1758 = dma.done %s1754, 512
        $region44: #{tpu_custom_call.1} parent=39 // pred_fallthru
          _
      $region40: #{tpu_custom_call.1} parent=5 // pred_fallthru
        _
    $region6: #{tpu_custom_call.1} parent=1 // loop_footer
      %s16 = sadd.s32 1, %s12
    $region7: #{tpu_custom_call.1} parent=1 // loop_footer_branch
      %11 = sbr.rel target = $region3
    $region8: #{tpu_custom_call.1} parent=1 // loop_exit
      _
    %1759 = vsyncpa [#allocation4], 1
    %s1760 = scalar_lea.sflag [#allocation4], 1
    %1761 = vsyncpa %s1760, 1

</llo_original>
